<compile_context>
chip_gen: v6e
topology: v6e:2x2x1
jax: 0.10.0
libtpu: 0.0.40
codegen_flags: <defaults>
</compile_context>

<pallas_src>
import math

import jax
import jax.numpy as jnp
from jax.experimental import pallas as pl
from jax.experimental.pallas import tpu as pltpu

# ----------------------------- model config (small) -----------------------------
D_MODEL = 32
N_HEADS = 4
HEAD_DIM = D_MODEL // N_HEADS
N_LAYERS = 2
VOCAB = 64
VOCAB_PAD = 128          # lane-dense logits slab (multiple of 128)
MAX_SEQ = 16
BATCH = 2
SEQ = 8
TOKENS = BATCH * SEQ     # flattened B*S rows
LN_EPS = 1e-5
NEG_INF = -1e30          # f32 additive mask (kept in f32 score math)
LANES = 4 * D_MODEL      # 128 — packing width of all slabs

# ---- per-layer weight-slab row offsets (every row is 128 lanes wide) ----
ROW_WQKVO = 0                        # rows [  0, 32): [wq | wk | wv | wo]
ROW_W1 = D_MODEL                     # rows [ 32, 64): w1
ROW_W2 = 2 * D_MODEL                 # rows [ 64,192): w2 (lanes >= 32 zero)
ROW_PAR = ROW_W2 + 4 * D_MODEL       # rows [192,200): bias / layernorm rows
LAYER_ROWS = ROW_PAR + 8             # 200

# ---- misc-slab row offsets ----
M_WTE = 0                            # rows [  0, 64): wte       (lanes [0,32))
M_POS = VOCAB                        # rows [ 64, 80): pos_emb   (lanes [0,32))
M_WOUT = M_POS + TOKENS              # rows [ 80,112): fc_out W  (vocab-padded, 128 lanes)
M_BOUT = M_WOUT + D_MODEL            # row   112     : fc_out b
M_BIAS = 120                         # rows [120,136): causal+batch bias (lanes [0,16))
MISC_ROWS = M_BIAS + TOKENS          # 136


# ----------------------------- fused Pallas kernel -------------------------------
def _layer_norm(x, w, b):
    mu = jnp.mean(x, axis=-1, keepdims=True)
    xc = x - mu
    var = jnp.mean(xc * xc, axis=-1, keepdims=True)
    return xc * jax.lax.rsqrt(var + LN_EPS) * w + b


def gpt_fused_kernel(tok_ref, misc_ref, layer_ref, logits_ref, kv_ref):
    f32, bf16 = jnp.float32, jnp.bfloat16
    T, D, H, hd, V = TOKENS, D_MODEL, N_HEADS, HEAD_DIM, VOCAB
    scale = 1.0 / math.sqrt(hd)

    # --- embeddings: data-dependent token gather (one-hot @ wte) + precomputed pos ---
    tok = tok_ref[...]                                            # (T, 1) int32
    vocab_iota = jax.lax.broadcasted_iota(jnp.int32, (T, V), 1)
    tok_oh = (tok == vocab_iota).astype(f32)                      # (T, V) exact 0/1
    wte = misc_ref[M_WTE:M_WTE + V, 0:D]                          # (V, D)
    pos = misc_ref[M_POS:M_POS + T, 0:D]                          # (T, D)
    x = jnp.dot(tok_oh, wte, preferred_element_type=f32) + pos    # (T, D) f32

    attn_bias = misc_ref[M_BIAS:M_BIAS + T, 0:T]                  # (T, T) f32

    kv_parts = []
    for l in range(N_LAYERS):                                     # static unroll
        # packed per-layer weights (sublane-range slices, full 128 lanes)
        wqkvo = layer_ref[l, ROW_WQKVO:ROW_WQKVO + D, :]          # (D, 128) [wq|wk|wv|wo]
        w1 = layer_ref[l, ROW_W1:ROW_W1 + D, :]                   # (D, 128)
        w2p = layer_ref[l, ROW_W2:ROW_W2 + 4 * D, :]              # (128, 128), lanes>=D zero
        b_qkv = layer_ref[l, ROW_PAR + 0:ROW_PAR + 1, :]          # (1, 128)  [bq|bk|bv|0]
        b1 = layer_ref[l, ROW_PAR + 1:ROW_PAR + 2, :]             # (1, 128)
        ln_row = layer_ref[l, ROW_PAR + 2:ROW_PAR + 3, :]         # (1, 128)  [ln1w|ln1b|ln2w|ln2b]
        ob_row = layer_ref[l, ROW_PAR + 3:ROW_PAR + 4, :]         # (1, 128)  [bo|b2|0|0]
        ln1w, ln1b = ln_row[:, 0:D], ln_row[:, D:2 * D]
        ln2w, ln2b = ln_row[:, 2 * D:3 * D], ln_row[:, 3 * D:4 * D]
        bo, b2 = ob_row[:, 0:D], ob_row[:, D:2 * D]

        # --- LN1 + single fused QKV projection: one (T,D)@(D,128) MXU pass ---
        xn = _layer_norm(x, ln1w, ln1b)                           # (T, D) f32
        qkv = jnp.dot(xn.astype(bf16), wqkvo.astype(bf16),
                      preferred_element_type=f32) + b_qkv         # (T, 128)
        q = qkv[:, 0:D]
        k = qkv[:, D:2 * D]
        v = qkv[:, 2 * D:3 * D]
        kv_parts += [k, v]                                        # written once, lane-dense

        # --- attention: per-head score/softmax/weighted-sum (inherently small) ---
        o_parts = []
        for h in range(H):
            qh = q[:, h * hd:(h + 1) * hd].astype(bf16)           # (T, hd)
            kh = k[:, h * hd:(h + 1) * hd].astype(bf16)
            vh = v[:, h * hd:(h + 1) * hd].astype(bf16)
            s = jnp.einsum('qd,kd->qk', qh, kh,
                           preferred_element_type=f32) * scale + attn_bias   # (T, T) f32
            s = s - jnp.max(s, axis=-1, keepdims=True)
            p = jnp.exp(s)
            p = p * pl.reciprocal(jnp.sum(p, axis=-1, keepdims=True), approx=True)
            o_parts.append(jnp.dot(p.astype(bf16), vh, preferred_element_type=f32))
        o_flat = jnp.concatenate(o_parts, axis=-1)                # (T, D)

        # --- single (T,D)@(D,D) output projection (no per-head matmuls / head sum) ---
        wo = wqkvo[:, 3 * D:4 * D]                                # (D, D)
        attn_out = jnp.dot(o_flat.astype(bf16), wo.astype(bf16),
                           preferred_element_type=f32) + bo
        x = x + attn_out                                          # residual 1

        # --- LN2 + MLP (ReLU); both matmuls 128-lane wide; dropout == identity ---
        x2 = _layer_norm(x, ln2w, ln2b)
        h1 = jnp.dot(x2.astype(bf16), w1.astype(bf16), preferred_element_type=f32) + b1
        h1 = jnp.maximum(h1, 0.0)                                 # (T, 128)
        mlp = jnp.dot(h1.astype(bf16), w2p.astype(bf16), preferred_element_type=f32)
        x = x + mlp[:, 0:D] + b2                                  # residual 2

    # --- final vocab projection: lane-dense (T, 128), one unmasked store ---
    wout = misc_ref[M_WOUT:M_WOUT + D, :]                         # (D, 128)
    bout = misc_ref[M_BOUT:M_BOUT + 1, :]                         # (1, 128)
    logits_ref[...] = jnp.dot(x.astype(bf16), wout.astype(bf16),
                              preferred_element_type=f32) + bout

    # --- lane-dense KV cache [K0|V0|K1|V1]: one unmasked (T, 128) store ---
    kv_ref[...] = jnp.concatenate(kv_parts, axis=-1)


# ----------------------------- wrapper --------------------------------------------
def _fullspec(shape):
    nd = len(shape)
    return pl.BlockSpec(shape, lambda i, _nd=nd: (0,) * _nd)


def _pad_lanes(a, width=LANES):
    return jnp.pad(a, ((0, 0), (0, width - a.shape[-1])))


def gpt_forward(tokens, params):
    """tokens: (B, S) int32 -> (logits (B,S,V), [(K,V)] * layers). past_length=0."""
    B, S = tokens.shape
    T = B * S
    D, L, V = D_MODEL, N_LAYERS, VOCAB

    # ---- pack per-layer weights into ONE lane-dense slab (L, 200, 128) ----
    slabs = []
    for lp in params["layers"]:
        wqkvo = jnp.concatenate([lp["wq"], lp["wk"], lp["wv"], lp["wo"]], axis=1)   # (D, 4D)
        w2p = _pad_lanes(lp["w2"])                                                  # (4D, 4D)
        b_qkv = jnp.concatenate([lp["bq"], lp["bk"], lp["bv"],
                                 jnp.zeros((1, D), jnp.float32)], axis=1)           # (1, 4D)
        ln_row = jnp.concatenate([lp["ln1_w"], lp["ln1_b"],
                                  lp["ln2_w"], lp["ln2_b"]], axis=1)                # (1, 4D)
        ob_row = jnp.concatenate([lp["bo"], lp["b2"],
                                  jnp.zeros((1, 2 * D), jnp.float32)], axis=1)      # (1, 4D)
        par = jnp.concatenate([b_qkv, lp["b1"], ln_row, ob_row,
                               jnp.zeros((4, LANES), jnp.float32)], axis=0)         # (8, 4D)
        slabs.append(jnp.concatenate([wqkvo, lp["w1"], w2p, par], axis=0))          # (200, 4D)
    layer_slab = jnp.stack(slabs, axis=0)                                           # (L, 200, 128)

    # ---- misc slab: wte, pre-gathered pos-emb, padded fc_out, causal+batch bias ----
    pos_idx = jnp.arange(T) % S                                   # past_length = 0 (prefill)
    pos_emb = params["wpe"][pos_idx]                              # (T, D)
    wout = jnp.zeros((D, VOCAB_PAD), jnp.float32).at[:, :V].set(params["fc_out_w"])
    bout = jnp.zeros((1, VOCAB_PAD), jnp.float32).at[:, :V].set(params["fc_out_b"])
    r = jnp.arange(T)[:, None]
    c = jnp.arange(T)[None, :]
    allowed = (r // S == c // S) & (r >= c)                       # same batch & causal
    attn_bias = jnp.where(allowed, 0.0, NEG_INF).astype(jnp.float32)   # (T, T)
    misc = jnp.concatenate([
        _pad_lanes(params["wte"]),                                # rows [  0, 64)
        _pad_lanes(pos_emb),                                      # rows [ 64, 80)
        wout,                                                     # rows [ 80,112)
        bout,                                                     # row   112
        jnp.zeros((M_BIAS - (M_BOUT + 1), LANES), jnp.float32),   # rows [113,120)
        _pad_lanes(attn_bias),                                    # rows [120,136)
    ], axis=0)                                                    # (136, 128)

    tok_col = tokens.reshape(T, 1).astype(jnp.int32)

    out_shape = (
        jax.ShapeDtypeStruct((T, VOCAB_PAD), jnp.float32),        # padded logits (lane-dense)
        jax.ShapeDtypeStruct((T, 2 * L * D), jnp.float32),        # [K0|V0|K1|V1] (lane-dense)
    )

    # Single fused call, grid=(1,): 3 input DMAs, 2 unmasked (16,128) output stores.
    logits_pad, kv_pack = pl.pallas_call(
        gpt_fused_kernel,
        out_shape=out_shape,
        grid=(1,),
        in_specs=[_fullspec(tok_col.shape), _fullspec(misc.shape),
                  _fullspec(layer_slab.shape)],
        out_specs=(_fullspec((T, VOCAB_PAD)), _fullspec((T, 2 * L * D))),
        compiler_params=pltpu.CompilerParams(
            dimension_semantics=("arbitrary",)),
    )(tok_col, misc, layer_slab)

    logits = logits_pad[:, :V].reshape(B, S, V)
    kv_cache = []
    for l in range(L):
        k = kv_pack[:, (2 * l) * D:(2 * l + 1) * D].reshape(B, S, D)
        v = kv_pack[:, (2 * l + 1) * D:(2 * l + 2) * D].reshape(B, S, D)
        kv_cache.append((k, v))
    return logits, kv_cache


# ----------------------------- deterministic params ------------------------------
def init_params(key):
    def nxt():
        nonlocal key
        key, sub = jax.random.split(key)
        return sub

    def dense(shape, scale=0.02):
        return (scale * jax.random.normal(nxt(), shape)).astype(jnp.float32)

    D = D_MODEL
    params = {
        "wte": dense((VOCAB, D)),
        "wpe": dense((MAX_SEQ, D)),
        "fc_out_w": dense((D, VOCAB)),
        "fc_out_b": jnp.zeros((1, VOCAB), jnp.float32),
        "layers": [],
    }
    for _ in range(N_LAYERS):
        params["layers"].append({
            "ln1_w": jnp.ones((1, D), jnp.float32),
            "ln1_b": jnp.zeros((1, D), jnp.float32),
            "wq": dense((D, D)), "bq": jnp.zeros((1, D), jnp.float32),
            "wk": dense((D, D)), "bk": jnp.zeros((1, D), jnp.float32),
            "wv": dense((D, D)), "bv": jnp.zeros((1, D), jnp.float32),
            "wo": dense((D, D)), "bo": jnp.zeros((1, D), jnp.float32),
            "ln2_w": jnp.ones((1, D), jnp.float32),
            "ln2_b": jnp.zeros((1, D), jnp.float32),
            "w1": dense((D, 4 * D)), "b1": jnp.zeros((1, 4 * D), jnp.float32),
            "w2": dense((4 * D, D)), "b2": jnp.zeros((1, D), jnp.float32),
        })
    return params


# ----------------------------- main ----------------------------------------------
if __name__ == "__main__":
    key = jax.random.PRNGKey(0)
    pkey, tkey = jax.random.split(key)
    params = init_params(pkey)
    tokens = jax.random.randint(tkey, (BATCH, SEQ), 0, VOCAB, dtype=jnp.int32)

    logits, kv_cache = gpt_forward(tokens, params)
    jax.block_until_ready(logits)
    for k, v in kv_cache:
        jax.block_until_ready(k)
        jax.block_until_ready(v)

    assert logits.shape == (BATCH, SEQ, VOCAB)
    assert len(kv_cache) == N_LAYERS
    assert kv_cache[0][0].shape == (BATCH, SEQ, D_MODEL)
    assert bool(jnp.all(jnp.isfinite(logits)))
    # TODO(synk): dropout(p=0.1) is identity (eval mode); torch.autocast ignored
    #             (fp32 params, bf16 MXU operands); past_length fixed to 0
    #             (prefill only, no incremental KV-cache read).
    print("KERNEL_OK")
</pallas_src>

<mosaic_0001>
module attributes {stable_mosaic.version = 11 : i64} {
  func.func @gpt_fused_kernel(%arg0: i32, %arg1: memref<16x1xi32, #tpu.memory_space<vmem>>, %arg2: memref<136x128xf32, #tpu.memory_space<vmem>>, %arg3: memref<2x200x128xf32, #tpu.memory_space<vmem>>, %arg4: memref<16x128xf32, #tpu.memory_space<vmem>>, %arg5: memref<16x128xf32, #tpu.memory_space<vmem>>) attributes {dimension_semantics = [#tpu.dimension_semantics<arbitrary>], iteration_bounds = array<i64: 1>, scalar_prefetch = 0 : i64, scratch_operands = 0 : i64, tpu.core_type = #tpu.core_type<tc>, window_params = [{pipeline_mode = #tpu.pipeline_mode<synchronous>, transform_indices = @transform_0, window_bounds = array<i64: 16, 1>}, {pipeline_mode = #tpu.pipeline_mode<synchronous>, transform_indices = @transform_1, window_bounds = array<i64: 136, 128>}, {pipeline_mode = #tpu.pipeline_mode<synchronous>, transform_indices = @transform_2, window_bounds = array<i64: 2, 200, 128>}, {pipeline_mode = #tpu.pipeline_mode<synchronous>, transform_indices = @transform_3, window_bounds = array<i64: 16, 128>}, {pipeline_mode = #tpu.pipeline_mode<synchronous>, transform_indices = @transform_4, window_bounds = array<i64: 16, 128>}]} {
    %c0 = arith.constant 0 : index
    %c0_0 = arith.constant 0 : index
    %0 = vector.load %arg1[%c0, %c0_0] : memref<16x1xi32, #tpu.memory_space<vmem>>, vector<16x1xi32>
    %1 = tpu.iota {dimensions = array<i32: 1>} : vector<16x64xi32>
    %2 = vector.broadcast %0 : vector<16x1xi32> to vector<16x64xi32>
    %3 = arith.cmpi eq, %2, %1 : vector<16x64xi32>
    %4 = arith.extui %3 : vector<16x64xi1> to vector<16x64xi32>
    %5 = arith.sitofp %4 : vector<16x64xi32> to vector<16x64xf32>
    %c0_1 = arith.constant 0 : index
    %c0_2 = arith.constant 0 : index
    %6 = vector.load %arg2[%c0_1, %c0_2] : memref<136x128xf32, #tpu.memory_space<vmem>>, vector<64x32xf32>
    %c64 = arith.constant 64 : index
    %c0_3 = arith.constant 0 : index
    %7 = vector.load %arg2[%c64, %c0_3] : memref<136x128xf32, #tpu.memory_space<vmem>>, vector<16x32xf32>
    %cst = arith.constant dense<0.000000e+00> : vector<16x32xf32>
    %8 = tpu.matmul %5, %6, %cst {dimension_numbers = #tpu.dot_dimension_numbers<[1], [0], [0], [1], [0, 0, 1, 1], [], []>} : vector<16x64xf32>, vector<64x32xf32>, vector<16x32xf32> -> vector<16x32xf32>
    %9 = arith.addf %8, %7 : vector<16x32xf32>
    %c120 = arith.constant 120 : index
    %c0_4 = arith.constant 0 : index
    %10 = vector.load %arg2[%c120, %c0_4] : memref<136x128xf32, #tpu.memory_space<vmem>>, vector<16x16xf32>
    %c0_5 = arith.constant 0 : index
    %c0_6 = arith.constant 0 : index
    %c0_7 = arith.constant 0 : index
    %11 = vector.load %arg3[%c0_5, %c0_6, %c0_7] : memref<2x200x128xf32, #tpu.memory_space<vmem>>, vector<1x32x128xf32>
    %12 = vector.shape_cast %11 : vector<1x32x128xf32> to vector<32x128xf32>
    %c0_8 = arith.constant 0 : index
    %c32 = arith.constant 32 : index
    %c0_9 = arith.constant 0 : index
    %13 = vector.load %arg3[%c0_8, %c32, %c0_9] : memref<2x200x128xf32, #tpu.memory_space<vmem>>, vector<1x32x128xf32>
    %14 = vector.shape_cast %13 : vector<1x32x128xf32> to vector<32x128xf32>
    %c0_10 = arith.constant 0 : index
    %c64_11 = arith.constant 64 : index
    %c0_12 = arith.constant 0 : index
    %15 = vector.load %arg3[%c0_10, %c64_11, %c0_12] : memref<2x200x128xf32, #tpu.memory_space<vmem>>, vector<1x128x128xf32>
    %16 = vector.shape_cast %15 : vector<1x128x128xf32> to vector<128x128xf32>
    %c0_13 = arith.constant 0 : index
    %c192 = arith.constant 192 : index
    %c0_14 = arith.constant 0 : index
    %17 = vector.load %arg3[%c0_13, %c192, %c0_14] : memref<2x200x128xf32, #tpu.memory_space<vmem>>, vector<1x1x128xf32>
    %18 = vector.shape_cast %17 : vector<1x1x128xf32> to vector<1x128xf32>
    %c0_15 = arith.constant 0 : index
    %c193 = arith.constant 193 : index
    %c0_16 = arith.constant 0 : index
    %19 = vector.load %arg3[%c0_15, %c193, %c0_16] : memref<2x200x128xf32, #tpu.memory_space<vmem>>, vector<1x1x128xf32>
    %20 = vector.shape_cast %19 : vector<1x1x128xf32> to vector<1x128xf32>
    %c0_17 = arith.constant 0 : index
    %c194 = arith.constant 194 : index
    %c0_18 = arith.constant 0 : index
    %21 = vector.load %arg3[%c0_17, %c194, %c0_18] : memref<2x200x128xf32, #tpu.memory_space<vmem>>, vector<1x1x128xf32>
    %22 = vector.shape_cast %21 : vector<1x1x128xf32> to vector<1x128xf32>
    %c0_19 = arith.constant 0 : index
    %c195 = arith.constant 195 : index
    %c0_20 = arith.constant 0 : index
    %23 = vector.load %arg3[%c0_19, %c195, %c0_20] : memref<2x200x128xf32, #tpu.memory_space<vmem>>, vector<1x1x128xf32>
    %24 = vector.shape_cast %23 : vector<1x1x128xf32> to vector<1x128xf32>
    %25 = vector.extract_strided_slice %22 {offsets = [0, 0], sizes = [1, 32], strides = [1, 1]} : vector<1x128xf32> to vector<1x32xf32>
    %26 = vector.extract_strided_slice %22 {offsets = [0, 32], sizes = [1, 32], strides = [1, 1]} : vector<1x128xf32> to vector<1x32xf32>
    %27 = vector.extract_strided_slice %22 {offsets = [0, 64], sizes = [1, 32], strides = [1, 1]} : vector<1x128xf32> to vector<1x32xf32>
    %28 = vector.extract_strided_slice %22 {offsets = [0, 96], sizes = [1, 32], strides = [1, 1]} : vector<1x128xf32> to vector<1x32xf32>
    %29 = vector.extract_strided_slice %24 {offsets = [0, 0], sizes = [1, 32], strides = [1, 1]} : vector<1x128xf32> to vector<1x32xf32>
    %30 = vector.extract_strided_slice %24 {offsets = [0, 32], sizes = [1, 32], strides = [1, 1]} : vector<1x128xf32> to vector<1x32xf32>
    %cst_21 = arith.constant dense<0.000000e+00> : vector<16xf32>
    %31 = vector.multi_reduction <add>, %9, %cst_21 [1] : vector<16x32xf32> to vector<16xf32>
    %32 = vector.shape_cast %31 : vector<16xf32> to vector<16x1xf32>
    %cst_22 = arith.constant 3.200000e+01 : f32
    %33 = vector.broadcast %cst_22 : f32 to vector<16x1xf32>
    %34 = arith.divf %32, %33 : vector<16x1xf32>
    %35 = vector.broadcast %34 : vector<16x1xf32> to vector<16x32xf32>
    %36 = arith.subf %9, %35 : vector<16x32xf32>
    %37 = arith.mulf %36, %36 : vector<16x32xf32>
    %cst_23 = arith.constant dense<0.000000e+00> : vector<16xf32>
    %38 = vector.multi_reduction <add>, %37, %cst_23 [1] : vector<16x32xf32> to vector<16xf32>
    %39 = vector.shape_cast %38 : vector<16xf32> to vector<16x1xf32>
    %cst_24 = arith.constant 3.200000e+01 : f32
    %40 = vector.broadcast %cst_24 : f32 to vector<16x1xf32>
    %41 = arith.divf %39, %40 : vector<16x1xf32>
    %cst_25 = arith.constant 9.99999974E-6 : f32
    %42 = vector.broadcast %cst_25 : f32 to vector<16x1xf32>
    %43 = arith.addf %41, %42 : vector<16x1xf32>
    %44 = math.rsqrt %43 : vector<16x1xf32>
    %45 = vector.broadcast %44 : vector<16x1xf32> to vector<16x32xf32>
    %46 = arith.mulf %36, %45 : vector<16x32xf32>
    %47 = vector.broadcast %25 : vector<1x32xf32> to vector<16x32xf32>
    %48 = arith.mulf %46, %47 : vector<16x32xf32>
    %49 = vector.broadcast %26 : vector<1x32xf32> to vector<16x32xf32>
    %50 = arith.addf %48, %49 : vector<16x32xf32>
    %51 = arith.truncf %50 : vector<16x32xf32> to vector<16x32xbf16>
    %52 = arith.truncf %12 : vector<32x128xf32> to vector<32x128xbf16>
    %cst_26 = arith.constant dense<0.000000e+00> : vector<16x128xf32>
    %53 = tpu.matmul %51, %52, %cst_26 {dimension_numbers = #tpu.dot_dimension_numbers<[1], [0], [0], [1], [0, 0, 1, 1], [], []>} : vector<16x32xbf16>, vector<32x128xbf16>, vector<16x128xf32> -> vector<16x128xf32>
    %54 = vector.broadcast %18 : vector<1x128xf32> to vector<16x128xf32>
    %55 = arith.addf %53, %54 : vector<16x128xf32>
    %56 = vector.extract_strided_slice %55 {offsets = [0, 0], sizes = [16, 32], strides = [1, 1]} : vector<16x128xf32> to vector<16x32xf32>
    %57 = vector.extract_strided_slice %55 {offsets = [0, 32], sizes = [16, 32], strides = [1, 1]} : vector<16x128xf32> to vector<16x32xf32>
    %58 = vector.extract_strided_slice %55 {offsets = [0, 64], sizes = [16, 32], strides = [1, 1]} : vector<16x128xf32> to vector<16x32xf32>
    %59 = vector.extract_strided_slice %56 {offsets = [0, 0], sizes = [16, 8], strides = [1, 1]} : vector<16x32xf32> to vector<16x8xf32>
    %60 = arith.truncf %59 : vector<16x8xf32> to vector<16x8xbf16>
    %61 = vector.extract_strided_slice %57 {offsets = [0, 0], sizes = [16, 8], strides = [1, 1]} : vector<16x32xf32> to vector<16x8xf32>
    %62 = arith.truncf %61 : vector<16x8xf32> to vector<16x8xbf16>
    %63 = vector.extract_strided_slice %58 {offsets = [0, 0], sizes = [16, 8], strides = [1, 1]} : vector<16x32xf32> to vector<16x8xf32>
    %64 = arith.truncf %63 : vector<16x8xf32> to vector<16x8xbf16>
    "tpu.trace_start"() <{level = 10 : i32, message = "qd,kd->qk"}> : () -> ()
    %cst_27 = arith.constant dense<0.000000e+00> : vector<16x16xf32>
    %65 = tpu.matmul %60, %62, %cst_27 {dimension_numbers = #tpu.dot_dimension_numbers<[1], [1], [0], [0], [0, 0, 1, 0], [], []>} : vector<16x8xbf16>, vector<16x8xbf16>, vector<16x16xf32> -> vector<16x16xf32>
    "tpu.trace_stop"() : () -> ()
    %cst_28 = arith.constant 0.353553385 : f32
    %66 = vector.broadcast %cst_28 : f32 to vector<16x16xf32>
    %67 = arith.mulf %65, %66 : vector<16x16xf32>
    %68 = arith.addf %67, %10 : vector<16x16xf32>
    %cst_29 = arith.constant dense<0xFF800000> : vector<16xf32>
    %69 = vector.multi_reduction <maximumf>, %68, %cst_29 [1] : vector<16x16xf32> to vector<16xf32>
    %70 = vector.shape_cast %69 : vector<16xf32> to vector<16x1xf32>
    %71 = vector.broadcast %70 : vector<16x1xf32> to vector<16x16xf32>
    %72 = arith.subf %68, %71 : vector<16x16xf32>
    %73 = math.exp %72 : vector<16x16xf32>
    %cst_30 = arith.constant dense<0.000000e+00> : vector<16xf32>
    %74 = vector.multi_reduction <add>, %73, %cst_30 [1] : vector<16x16xf32> to vector<16xf32>
    %75 = vector.shape_cast %74 : vector<16xf32> to vector<16x1xf32>
    %76 = tpu.reciprocal %75 {approx = true} : vector<16x1xf32> -> vector<16x1xf32>
    %77 = vector.broadcast %76 : vector<16x1xf32> to vector<16x16xf32>
    %78 = arith.mulf %73, %77 : vector<16x16xf32>
    %79 = arith.truncf %78 : vector<16x16xf32> to vector<16x16xbf16>
    %cst_31 = arith.constant dense<0.000000e+00> : vector<16x8xf32>
    %80 = tpu.matmul %79, %64, %cst_31 {dimension_numbers = #tpu.dot_dimension_numbers<[1], [0], [0], [1], [0, 0, 1, 1], [], []>} : vector<16x16xbf16>, vector<16x8xbf16>, vector<16x8xf32> -> vector<16x8xf32>
    %81 = vector.extract_strided_slice %56 {offsets = [0, 8], sizes = [16, 8], strides = [1, 1]} : vector<16x32xf32> to vector<16x8xf32>
    %82 = arith.truncf %81 : vector<16x8xf32> to vector<16x8xbf16>
    %83 = vector.extract_strided_slice %57 {offsets = [0, 8], sizes = [16, 8], strides = [1, 1]} : vector<16x32xf32> to vector<16x8xf32>
    %84 = arith.truncf %83 : vector<16x8xf32> to vector<16x8xbf16>
    %85 = vector.extract_strided_slice %58 {offsets = [0, 8], sizes = [16, 8], strides = [1, 1]} : vector<16x32xf32> to vector<16x8xf32>
    %86 = arith.truncf %85 : vector<16x8xf32> to vector<16x8xbf16>
    "tpu.trace_start"() <{level = 10 : i32, message = "qd,kd->qk"}> : () -> ()
    %cst_32 = arith.constant dense<0.000000e+00> : vector<16x16xf32>
    %87 = tpu.matmul %82, %84, %cst_32 {dimension_numbers = #tpu.dot_dimension_numbers<[1], [1], [0], [0], [0, 0, 1, 0], [], []>} : vector<16x8xbf16>, vector<16x8xbf16>, vector<16x16xf32> -> vector<16x16xf32>
    "tpu.trace_stop"() : () -> ()
    %cst_33 = arith.constant 0.353553385 : f32
    %88 = vector.broadcast %cst_33 : f32 to vector<16x16xf32>
    %89 = arith.mulf %87, %88 : vector<16x16xf32>
    %90 = arith.addf %89, %10 : vector<16x16xf32>
    %cst_34 = arith.constant dense<0xFF800000> : vector<16xf32>
    %91 = vector.multi_reduction <maximumf>, %90, %cst_34 [1] : vector<16x16xf32> to vector<16xf32>
    %92 = vector.shape_cast %91 : vector<16xf32> to vector<16x1xf32>
    %93 = vector.broadcast %92 : vector<16x1xf32> to vector<16x16xf32>
    %94 = arith.subf %90, %93 : vector<16x16xf32>
    %95 = math.exp %94 : vector<16x16xf32>
    %cst_35 = arith.constant dense<0.000000e+00> : vector<16xf32>
    %96 = vector.multi_reduction <add>, %95, %cst_35 [1] : vector<16x16xf32> to vector<16xf32>
    %97 = vector.shape_cast %96 : vector<16xf32> to vector<16x1xf32>
    %98 = tpu.reciprocal %97 {approx = true} : vector<16x1xf32> -> vector<16x1xf32>
    %99 = vector.broadcast %98 : vector<16x1xf32> to vector<16x16xf32>
    %100 = arith.mulf %95, %99 : vector<16x16xf32>
    %101 = arith.truncf %100 : vector<16x16xf32> to vector<16x16xbf16>
    %cst_36 = arith.constant dense<0.000000e+00> : vector<16x8xf32>
    %102 = tpu.matmul %101, %86, %cst_36 {dimension_numbers = #tpu.dot_dimension_numbers<[1], [0], [0], [1], [0, 0, 1, 1], [], []>} : vector<16x16xbf16>, vector<16x8xbf16>, vector<16x8xf32> -> vector<16x8xf32>
    %103 = vector.extract_strided_slice %56 {offsets = [0, 16], sizes = [16, 8], strides = [1, 1]} : vector<16x32xf32> to vector<16x8xf32>
    %104 = arith.truncf %103 : vector<16x8xf32> to vector<16x8xbf16>
    %105 = vector.extract_strided_slice %57 {offsets = [0, 16], sizes = [16, 8], strides = [1, 1]} : vector<16x32xf32> to vector<16x8xf32>
    %106 = arith.truncf %105 : vector<16x8xf32> to vector<16x8xbf16>
    %107 = vector.extract_strided_slice %58 {offsets = [0, 16], sizes = [16, 8], strides = [1, 1]} : vector<16x32xf32> to vector<16x8xf32>
    %108 = arith.truncf %107 : vector<16x8xf32> to vector<16x8xbf16>
    "tpu.trace_start"() <{level = 10 : i32, message = "qd,kd->qk"}> : () -> ()
    %cst_37 = arith.constant dense<0.000000e+00> : vector<16x16xf32>
    %109 = tpu.matmul %104, %106, %cst_37 {dimension_numbers = #tpu.dot_dimension_numbers<[1], [1], [0], [0], [0, 0, 1, 0], [], []>} : vector<16x8xbf16>, vector<16x8xbf16>, vector<16x16xf32> -> vector<16x16xf32>
    "tpu.trace_stop"() : () -> ()
    %cst_38 = arith.constant 0.353553385 : f32
    %110 = vector.broadcast %cst_38 : f32 to vector<16x16xf32>
    %111 = arith.mulf %109, %110 : vector<16x16xf32>
    %112 = arith.addf %111, %10 : vector<16x16xf32>
    %cst_39 = arith.constant dense<0xFF800000> : vector<16xf32>
    %113 = vector.multi_reduction <maximumf>, %112, %cst_39 [1] : vector<16x16xf32> to vector<16xf32>
    %114 = vector.shape_cast %113 : vector<16xf32> to vector<16x1xf32>
    %115 = vector.broadcast %114 : vector<16x1xf32> to vector<16x16xf32>
    %116 = arith.subf %112, %115 : vector<16x16xf32>
    %117 = math.exp %116 : vector<16x16xf32>
    %cst_40 = arith.constant dense<0.000000e+00> : vector<16xf32>
    %118 = vector.multi_reduction <add>, %117, %cst_40 [1] : vector<16x16xf32> to vector<16xf32>
    %119 = vector.shape_cast %118 : vector<16xf32> to vector<16x1xf32>
    %120 = tpu.reciprocal %119 {approx = true} : vector<16x1xf32> -> vector<16x1xf32>
    %121 = vector.broadcast %120 : vector<16x1xf32> to vector<16x16xf32>
    %122 = arith.mulf %117, %121 : vector<16x16xf32>
    %123 = arith.truncf %122 : vector<16x16xf32> to vector<16x16xbf16>
    %cst_41 = arith.constant dense<0.000000e+00> : vector<16x8xf32>
    %124 = tpu.matmul %123, %108, %cst_41 {dimension_numbers = #tpu.dot_dimension_numbers<[1], [0], [0], [1], [0, 0, 1, 1], [], []>} : vector<16x16xbf16>, vector<16x8xbf16>, vector<16x8xf32> -> vector<16x8xf32>
    %125 = vector.extract_strided_slice %56 {offsets = [0, 24], sizes = [16, 8], strides = [1, 1]} : vector<16x32xf32> to vector<16x8xf32>
    %126 = arith.truncf %125 : vector<16x8xf32> to vector<16x8xbf16>
    %127 = vector.extract_strided_slice %57 {offsets = [0, 24], sizes = [16, 8], strides = [1, 1]} : vector<16x32xf32> to vector<16x8xf32>
    %128 = arith.truncf %127 : vector<16x8xf32> to vector<16x8xbf16>
    %129 = vector.extract_strided_slice %58 {offsets = [0, 24], sizes = [16, 8], strides = [1, 1]} : vector<16x32xf32> to vector<16x8xf32>
    %130 = arith.truncf %129 : vector<16x8xf32> to vector<16x8xbf16>
    "tpu.trace_start"() <{level = 10 : i32, message = "qd,kd->qk"}> : () -> ()
    %cst_42 = arith.constant dense<0.000000e+00> : vector<16x16xf32>
    %131 = tpu.matmul %126, %128, %cst_42 {dimension_numbers = #tpu.dot_dimension_numbers<[1], [1], [0], [0], [0, 0, 1, 0], [], []>} : vector<16x8xbf16>, vector<16x8xbf16>, vector<16x16xf32> -> vector<16x16xf32>
    "tpu.trace_stop"() : () -> ()
    %cst_43 = arith.constant 0.353553385 : f32
    %132 = vector.broadcast %cst_43 : f32 to vector<16x16xf32>
    %133 = arith.mulf %131, %132 : vector<16x16xf32>
    %134 = arith.addf %133, %10 : vector<16x16xf32>
    %cst_44 = arith.constant dense<0xFF800000> : vector<16xf32>
    %135 = vector.multi_reduction <maximumf>, %134, %cst_44 [1] : vector<16x16xf32> to vector<16xf32>
    %136 = vector.shape_cast %135 : vector<16xf32> to vector<16x1xf32>
    %137 = vector.broadcast %136 : vector<16x1xf32> to vector<16x16xf32>
    %138 = arith.subf %134, %137 : vector<16x16xf32>
    %139 = math.exp %138 : vector<16x16xf32>
    %cst_45 = arith.constant dense<0.000000e+00> : vector<16xf32>
    %140 = vector.multi_reduction <add>, %139, %cst_45 [1] : vector<16x16xf32> to vector<16xf32>
    %141 = vector.shape_cast %140 : vector<16xf32> to vector<16x1xf32>
    %142 = tpu.reciprocal %141 {approx = true} : vector<16x1xf32> -> vector<16x1xf32>
    %143 = vector.broadcast %142 : vector<16x1xf32> to vector<16x16xf32>
    %144 = arith.mulf %139, %143 : vector<16x16xf32>
    %145 = arith.truncf %144 : vector<16x16xf32> to vector<16x16xbf16>
    %cst_46 = arith.constant dense<0.000000e+00> : vector<16x8xf32>
    %146 = tpu.matmul %145, %130, %cst_46 {dimension_numbers = #tpu.dot_dimension_numbers<[1], [0], [0], [1], [0, 0, 1, 1], [], []>} : vector<16x16xbf16>, vector<16x8xbf16>, vector<16x8xf32> -> vector<16x8xf32>
    %147 = tpu.concatenate %80, %102, %124, %146 in 1 : vector<16x8xf32>, vector<16x8xf32>, vector<16x8xf32>, vector<16x8xf32> -> vector<16x32xf32>
    %148 = vector.extract_strided_slice %12 {offsets = [0, 96], sizes = [32, 32], strides = [1, 1]} : vector<32x128xf32> to vector<32x32xf32>
    %149 = arith.truncf %147 : vector<16x32xf32> to vector<16x32xbf16>
    %150 = arith.truncf %148 : vector<32x32xf32> to vector<32x32xbf16>
    %cst_47 = arith.constant dense<0.000000e+00> : vector<16x32xf32>
    %151 = tpu.matmul %149, %150, %cst_47 {dimension_numbers = #tpu.dot_dimension_numbers<[1], [0], [0], [1], [0, 0, 1, 1], [], []>} : vector<16x32xbf16>, vector<32x32xbf16>, vector<16x32xf32> -> vector<16x32xf32>
    %152 = vector.broadcast %29 : vector<1x32xf32> to vector<16x32xf32>
    %153 = arith.addf %151, %152 : vector<16x32xf32>
    %154 = arith.addf %9, %153 : vector<16x32xf32>
    %cst_48 = arith.constant dense<0.000000e+00> : vector<16xf32>
    %155 = vector.multi_reduction <add>, %154, %cst_48 [1] : vector<16x32xf32> to vector<16xf32>
    %156 = vector.shape_cast %155 : vector<16xf32> to vector<16x1xf32>
    %cst_49 = arith.constant 3.200000e+01 : f32
    %157 = vector.broadcast %cst_49 : f32 to vector<16x1xf32>
    %158 = arith.divf %156, %157 : vector<16x1xf32>
    %159 = vector.broadcast %158 : vector<16x1xf32> to vector<16x32xf32>
    %160 = arith.subf %154, %159 : vector<16x32xf32>
    %161 = arith.mulf %160, %160 : vector<16x32xf32>
    %cst_50 = arith.constant dense<0.000000e+00> : vector<16xf32>
    %162 = vector.multi_reduction <add>, %161, %cst_50 [1] : vector<16x32xf32> to vector<16xf32>
    %163 = vector.shape_cast %162 : vector<16xf32> to vector<16x1xf32>
    %cst_51 = arith.constant 3.200000e+01 : f32
    %164 = vector.broadcast %cst_51 : f32 to vector<16x1xf32>
    %165 = arith.divf %163, %164 : vector<16x1xf32>
    %cst_52 = arith.constant 9.99999974E-6 : f32
    %166 = vector.broadcast %cst_52 : f32 to vector<16x1xf32>
    %167 = arith.addf %165, %166 : vector<16x1xf32>
    %168 = math.rsqrt %167 : vector<16x1xf32>
    %169 = vector.broadcast %168 : vector<16x1xf32> to vector<16x32xf32>
    %170 = arith.mulf %160, %169 : vector<16x32xf32>
    %171 = vector.broadcast %27 : vector<1x32xf32> to vector<16x32xf32>
    %172 = arith.mulf %170, %171 : vector<16x32xf32>
    %173 = vector.broadcast %28 : vector<1x32xf32> to vector<16x32xf32>
    %174 = arith.addf %172, %173 : vector<16x32xf32>
    %175 = arith.truncf %174 : vector<16x32xf32> to vector<16x32xbf16>
    %176 = arith.truncf %14 : vector<32x128xf32> to vector<32x128xbf16>
    %cst_53 = arith.constant dense<0.000000e+00> : vector<16x128xf32>
    %177 = tpu.matmul %175, %176, %cst_53 {dimension_numbers = #tpu.dot_dimension_numbers<[1], [0], [0], [1], [0, 0, 1, 1], [], []>} : vector<16x32xbf16>, vector<32x128xbf16>, vector<16x128xf32> -> vector<16x128xf32>
    %178 = vector.broadcast %20 : vector<1x128xf32> to vector<16x128xf32>
    %179 = arith.addf %177, %178 : vector<16x128xf32>
    %cst_54 = arith.constant 0.000000e+00 : f32
    %180 = vector.broadcast %cst_54 : f32 to vector<16x128xf32>
    %181 = arith.maximumf %179, %180 : vector<16x128xf32>
    %182 = arith.truncf %181 : vector<16x128xf32> to vector<16x128xbf16>
    %183 = arith.truncf %16 : vector<128x128xf32> to vector<128x128xbf16>
    %cst_55 = arith.constant dense<0.000000e+00> : vector<16x128xf32>
    %184 = tpu.matmul %182, %183, %cst_55 {dimension_numbers = #tpu.dot_dimension_numbers<[1], [0], [0], [1], [0, 0, 1, 1], [], []>} : vector<16x128xbf16>, vector<128x128xbf16>, vector<16x128xf32> -> vector<16x128xf32>
    %185 = vector.extract_strided_slice %184 {offsets = [0, 0], sizes = [16, 32], strides = [1, 1]} : vector<16x128xf32> to vector<16x32xf32>
    %186 = arith.addf %154, %185 : vector<16x32xf32>
    %187 = vector.broadcast %30 : vector<1x32xf32> to vector<16x32xf32>
    %188 = arith.addf %186, %187 : vector<16x32xf32>
    %c1 = arith.constant 1 : index
    %c0_56 = arith.constant 0 : index
    %c0_57 = arith.constant 0 : index
    %189 = vector.load %arg3[%c1, %c0_56, %c0_57] : memref<2x200x128xf32, #tpu.memory_space<vmem>>, vector<1x32x128xf32>
    %190 = vector.shape_cast %189 : vector<1x32x128xf32> to vector<32x128xf32>
    %c1_58 = arith.constant 1 : index
    %c32_59 = arith.constant 32 : index
    %c0_60 = arith.constant 0 : index
    %191 = vector.load %arg3[%c1_58, %c32_59, %c0_60] : memref<2x200x128xf32, #tpu.memory_space<vmem>>, vector<1x32x128xf32>
    %192 = vector.shape_cast %191 : vector<1x32x128xf32> to vector<32x128xf32>
    %c1_61 = arith.constant 1 : index
    %c64_62 = arith.constant 64 : index
    %c0_63 = arith.constant 0 : index
    %193 = vector.load %arg3[%c1_61, %c64_62, %c0_63] : memref<2x200x128xf32, #tpu.memory_space<vmem>>, vector<1x128x128xf32>
    %194 = vector.shape_cast %193 : vector<1x128x128xf32> to vector<128x128xf32>
    %c1_64 = arith.constant 1 : index
    %c192_65 = arith.constant 192 : index
    %c0_66 = arith.constant 0 : index
    %195 = vector.load %arg3[%c1_64, %c192_65, %c0_66] : memref<2x200x128xf32, #tpu.memory_space<vmem>>, vector<1x1x128xf32>
    %196 = vector.shape_cast %195 : vector<1x1x128xf32> to vector<1x128xf32>
    %c1_67 = arith.constant 1 : index
    %c193_68 = arith.constant 193 : index
    %c0_69 = arith.constant 0 : index
    %197 = vector.load %arg3[%c1_67, %c193_68, %c0_69] : memref<2x200x128xf32, #tpu.memory_space<vmem>>, vector<1x1x128xf32>
    %198 = vector.shape_cast %197 : vector<1x1x128xf32> to vector<1x128xf32>
    %c1_70 = arith.constant 1 : index
    %c194_71 = arith.constant 194 : index
    %c0_72 = arith.constant 0 : index
    %199 = vector.load %arg3[%c1_70, %c194_71, %c0_72] : memref<2x200x128xf32, #tpu.memory_space<vmem>>, vector<1x1x128xf32>
    %200 = vector.shape_cast %199 : vector<1x1x128xf32> to vector<1x128xf32>
    %c1_73 = arith.constant 1 : index
    %c195_74 = arith.constant 195 : index
    %c0_75 = arith.constant 0 : index
    %201 = vector.load %arg3[%c1_73, %c195_74, %c0_75] : memref<2x200x128xf32, #tpu.memory_space<vmem>>, vector<1x1x128xf32>
    %202 = vector.shape_cast %201 : vector<1x1x128xf32> to vector<1x128xf32>
    %203 = vector.extract_strided_slice %200 {offsets = [0, 0], sizes = [1, 32], strides = [1, 1]} : vector<1x128xf32> to vector<1x32xf32>
    %204 = vector.extract_strided_slice %200 {offsets = [0, 32], sizes = [1, 32], strides = [1, 1]} : vector<1x128xf32> to vector<1x32xf32>
    %205 = vector.extract_strided_slice %200 {offsets = [0, 64], sizes = [1, 32], strides = [1, 1]} : vector<1x128xf32> to vector<1x32xf32>
    %206 = vector.extract_strided_slice %200 {offsets = [0, 96], sizes = [1, 32], strides = [1, 1]} : vector<1x128xf32> to vector<1x32xf32>
    %207 = vector.extract_strided_slice %202 {offsets = [0, 0], sizes = [1, 32], strides = [1, 1]} : vector<1x128xf32> to vector<1x32xf32>
    %208 = vector.extract_strided_slice %202 {offsets = [0, 32], sizes = [1, 32], strides = [1, 1]} : vector<1x128xf32> to vector<1x32xf32>
    %cst_76 = arith.constant dense<0.000000e+00> : vector<16xf32>
    %209 = vector.multi_reduction <add>, %188, %cst_76 [1] : vector<16x32xf32> to vector<16xf32>
    %210 = vector.shape_cast %209 : vector<16xf32> to vector<16x1xf32>
    %cst_77 = arith.constant 3.200000e+01 : f32
    %211 = vector.broadcast %cst_77 : f32 to vector<16x1xf32>
    %212 = arith.divf %210, %211 : vector<16x1xf32>
    %213 = vector.broadcast %212 : vector<16x1xf32> to vector<16x32xf32>
    %214 = arith.subf %188, %213 : vector<16x32xf32>
    %215 = arith.mulf %214, %214 : vector<16x32xf32>
    %cst_78 = arith.constant dense<0.000000e+00> : vector<16xf32>
    %216 = vector.multi_reduction <add>, %215, %cst_78 [1] : vector<16x32xf32> to vector<16xf32>
    %217 = vector.shape_cast %216 : vector<16xf32> to vector<16x1xf32>
    %cst_79 = arith.constant 3.200000e+01 : f32
    %218 = vector.broadcast %cst_79 : f32 to vector<16x1xf32>
    %219 = arith.divf %217, %218 : vector<16x1xf32>
    %cst_80 = arith.constant 9.99999974E-6 : f32
    %220 = vector.broadcast %cst_80 : f32 to vector<16x1xf32>
    %221 = arith.addf %219, %220 : vector<16x1xf32>
    %222 = math.rsqrt %221 : vector<16x1xf32>
    %223 = vector.broadcast %222 : vector<16x1xf32> to vector<16x32xf32>
    %224 = arith.mulf %214, %223 : vector<16x32xf32>
    %225 = vector.broadcast %203 : vector<1x32xf32> to vector<16x32xf32>
    %226 = arith.mulf %224, %225 : vector<16x32xf32>
    %227 = vector.broadcast %204 : vector<1x32xf32> to vector<16x32xf32>
    %228 = arith.addf %226, %227 : vector<16x32xf32>
    %229 = arith.truncf %228 : vector<16x32xf32> to vector<16x32xbf16>
    %230 = arith.truncf %190 : vector<32x128xf32> to vector<32x128xbf16>
    %cst_81 = arith.constant dense<0.000000e+00> : vector<16x128xf32>
    %231 = tpu.matmul %229, %230, %cst_81 {dimension_numbers = #tpu.dot_dimension_numbers<[1], [0], [0], [1], [0, 0, 1, 1], [], []>} : vector<16x32xbf16>, vector<32x128xbf16>, vector<16x128xf32> -> vector<16x128xf32>
    %232 = vector.broadcast %196 : vector<1x128xf32> to vector<16x128xf32>
    %233 = arith.addf %231, %232 : vector<16x128xf32>
    %234 = vector.extract_strided_slice %233 {offsets = [0, 0], sizes = [16, 32], strides = [1, 1]} : vector<16x128xf32> to vector<16x32xf32>
    %235 = vector.extract_strided_slice %233 {offsets = [0, 32], sizes = [16, 32], strides = [1, 1]} : vector<16x128xf32> to vector<16x32xf32>
    %236 = vector.extract_strided_slice %233 {offsets = [0, 64], sizes = [16, 32], strides = [1, 1]} : vector<16x128xf32> to vector<16x32xf32>
    %237 = vector.extract_strided_slice %234 {offsets = [0, 0], sizes = [16, 8], strides = [1, 1]} : vector<16x32xf32> to vector<16x8xf32>
    %238 = arith.truncf %237 : vector<16x8xf32> to vector<16x8xbf16>
    %239 = vector.extract_strided_slice %235 {offsets = [0, 0], sizes = [16, 8], strides = [1, 1]} : vector<16x32xf32> to vector<16x8xf32>
    %240 = arith.truncf %239 : vector<16x8xf32> to vector<16x8xbf16>
    %241 = vector.extract_strided_slice %236 {offsets = [0, 0], sizes = [16, 8], strides = [1, 1]} : vector<16x32xf32> to vector<16x8xf32>
    %242 = arith.truncf %241 : vector<16x8xf32> to vector<16x8xbf16>
    "tpu.trace_start"() <{level = 10 : i32, message = "qd,kd->qk"}> : () -> ()
    %cst_82 = arith.constant dense<0.000000e+00> : vector<16x16xf32>
    %243 = tpu.matmul %238, %240, %cst_82 {dimension_numbers = #tpu.dot_dimension_numbers<[1], [1], [0], [0], [0, 0, 1, 0], [], []>} : vector<16x8xbf16>, vector<16x8xbf16>, vector<16x16xf32> -> vector<16x16xf32>
    "tpu.trace_stop"() : () -> ()
    %cst_83 = arith.constant 0.353553385 : f32
    %244 = vector.broadcast %cst_83 : f32 to vector<16x16xf32>
    %245 = arith.mulf %243, %244 : vector<16x16xf32>
    %246 = arith.addf %245, %10 : vector<16x16xf32>
    %cst_84 = arith.constant dense<0xFF800000> : vector<16xf32>
    %247 = vector.multi_reduction <maximumf>, %246, %cst_84 [1] : vector<16x16xf32> to vector<16xf32>
    %248 = vector.shape_cast %247 : vector<16xf32> to vector<16x1xf32>
    %249 = vector.broadcast %248 : vector<16x1xf32> to vector<16x16xf32>
    %250 = arith.subf %246, %249 : vector<16x16xf32>
    %251 = math.exp %250 : vector<16x16xf32>
    %cst_85 = arith.constant dense<0.000000e+00> : vector<16xf32>
    %252 = vector.multi_reduction <add>, %251, %cst_85 [1] : vector<16x16xf32> to vector<16xf32>
    %253 = vector.shape_cast %252 : vector<16xf32> to vector<16x1xf32>
    %254 = tpu.reciprocal %253 {approx = true} : vector<16x1xf32> -> vector<16x1xf32>
    %255 = vector.broadcast %254 : vector<16x1xf32> to vector<16x16xf32>
    %256 = arith.mulf %251, %255 : vector<16x16xf32>
    %257 = arith.truncf %256 : vector<16x16xf32> to vector<16x16xbf16>
    %cst_86 = arith.constant dense<0.000000e+00> : vector<16x8xf32>
    %258 = tpu.matmul %257, %242, %cst_86 {dimension_numbers = #tpu.dot_dimension_numbers<[1], [0], [0], [1], [0, 0, 1, 1], [], []>} : vector<16x16xbf16>, vector<16x8xbf16>, vector<16x8xf32> -> vector<16x8xf32>
    %259 = vector.extract_strided_slice %234 {offsets = [0, 8], sizes = [16, 8], strides = [1, 1]} : vector<16x32xf32> to vector<16x8xf32>
    %260 = arith.truncf %259 : vector<16x8xf32> to vector<16x8xbf16>
    %261 = vector.extract_strided_slice %235 {offsets = [0, 8], sizes = [16, 8], strides = [1, 1]} : vector<16x32xf32> to vector<16x8xf32>
    %262 = arith.truncf %261 : vector<16x8xf32> to vector<16x8xbf16>
    %263 = vector.extract_strided_slice %236 {offsets = [0, 8], sizes = [16, 8], strides = [1, 1]} : vector<16x32xf32> to vector<16x8xf32>
    %264 = arith.truncf %263 : vector<16x8xf32> to vector<16x8xbf16>
    "tpu.trace_start"() <{level = 10 : i32, message = "qd,kd->qk"}> : () -> ()
    %cst_87 = arith.constant dense<0.000000e+00> : vector<16x16xf32>
    %265 = tpu.matmul %260, %262, %cst_87 {dimension_numbers = #tpu.dot_dimension_numbers<[1], [1], [0], [0], [0, 0, 1, 0], [], []>} : vector<16x8xbf16>, vector<16x8xbf16>, vector<16x16xf32> -> vector<16x16xf32>
    "tpu.trace_stop"() : () -> ()
    %cst_88 = arith.constant 0.353553385 : f32
    %266 = vector.broadcast %cst_88 : f32 to vector<16x16xf32>
    %267 = arith.mulf %265, %266 : vector<16x16xf32>
    %268 = arith.addf %267, %10 : vector<16x16xf32>
    %cst_89 = arith.constant dense<0xFF800000> : vector<16xf32>
    %269 = vector.multi_reduction <maximumf>, %268, %cst_89 [1] : vector<16x16xf32> to vector<16xf32>
    %270 = vector.shape_cast %269 : vector<16xf32> to vector<16x1xf32>
    %271 = vector.broadcast %270 : vector<16x1xf32> to vector<16x16xf32>
    %272 = arith.subf %268, %271 : vector<16x16xf32>
    %273 = math.exp %272 : vector<16x16xf32>
    %cst_90 = arith.constant dense<0.000000e+00> : vector<16xf32>
    %274 = vector.multi_reduction <add>, %273, %cst_90 [1] : vector<16x16xf32> to vector<16xf32>
    %275 = vector.shape_cast %274 : vector<16xf32> to vector<16x1xf32>
    %276 = tpu.reciprocal %275 {approx = true} : vector<16x1xf32> -> vector<16x1xf32>
    %277 = vector.broadcast %276 : vector<16x1xf32> to vector<16x16xf32>
    %278 = arith.mulf %273, %277 : vector<16x16xf32>
    %279 = arith.truncf %278 : vector<16x16xf32> to vector<16x16xbf16>
    %cst_91 = arith.constant dense<0.000000e+00> : vector<16x8xf32>
    %280 = tpu.matmul %279, %264, %cst_91 {dimension_numbers = #tpu.dot_dimension_numbers<[1], [0], [0], [1], [0, 0, 1, 1], [], []>} : vector<16x16xbf16>, vector<16x8xbf16>, vector<16x8xf32> -> vector<16x8xf32>
    %281 = vector.extract_strided_slice %234 {offsets = [0, 16], sizes = [16, 8], strides = [1, 1]} : vector<16x32xf32> to vector<16x8xf32>
    %282 = arith.truncf %281 : vector<16x8xf32> to vector<16x8xbf16>
    %283 = vector.extract_strided_slice %235 {offsets = [0, 16], sizes = [16, 8], strides = [1, 1]} : vector<16x32xf32> to vector<16x8xf32>
    %284 = arith.truncf %283 : vector<16x8xf32> to vector<16x8xbf16>
    %285 = vector.extract_strided_slice %236 {offsets = [0, 16], sizes = [16, 8], strides = [1, 1]} : vector<16x32xf32> to vector<16x8xf32>
    %286 = arith.truncf %285 : vector<16x8xf32> to vector<16x8xbf16>
    "tpu.trace_start"() <{level = 10 : i32, message = "qd,kd->qk"}> : () -> ()
    %cst_92 = arith.constant dense<0.000000e+00> : vector<16x16xf32>
    %287 = tpu.matmul %282, %284, %cst_92 {dimension_numbers = #tpu.dot_dimension_numbers<[1], [1], [0], [0], [0, 0, 1, 0], [], []>} : vector<16x8xbf16>, vector<16x8xbf16>, vector<16x16xf32> -> vector<16x16xf32>
    "tpu.trace_stop"() : () -> ()
    %cst_93 = arith.constant 0.353553385 : f32
    %288 = vector.broadcast %cst_93 : f32 to vector<16x16xf32>
    %289 = arith.mulf %287, %288 : vector<16x16xf32>
    %290 = arith.addf %289, %10 : vector<16x16xf32>
    %cst_94 = arith.constant dense<0xFF800000> : vector<16xf32>
    %291 = vector.multi_reduction <maximumf>, %290, %cst_94 [1] : vector<16x16xf32> to vector<16xf32>
    %292 = vector.shape_cast %291 : vector<16xf32> to vector<16x1xf32>
    %293 = vector.broadcast %292 : vector<16x1xf32> to vector<16x16xf32>
    %294 = arith.subf %290, %293 : vector<16x16xf32>
    %295 = math.exp %294 : vector<16x16xf32>
    %cst_95 = arith.constant dense<0.000000e+00> : vector<16xf32>
    %296 = vector.multi_reduction <add>, %295, %cst_95 [1] : vector<16x16xf32> to vector<16xf32>
    %297 = vector.shape_cast %296 : vector<16xf32> to vector<16x1xf32>
    %298 = tpu.reciprocal %297 {approx = true} : vector<16x1xf32> -> vector<16x1xf32>
    %299 = vector.broadcast %298 : vector<16x1xf32> to vector<16x16xf32>
    %300 = arith.mulf %295, %299 : vector<16x16xf32>
    %301 = arith.truncf %300 : vector<16x16xf32> to vector<16x16xbf16>
    %cst_96 = arith.constant dense<0.000000e+00> : vector<16x8xf32>
    %302 = tpu.matmul %301, %286, %cst_96 {dimension_numbers = #tpu.dot_dimension_numbers<[1], [0], [0], [1], [0, 0, 1, 1], [], []>} : vector<16x16xbf16>, vector<16x8xbf16>, vector<16x8xf32> -> vector<16x8xf32>
    %303 = vector.extract_strided_slice %234 {offsets = [0, 24], sizes = [16, 8], strides = [1, 1]} : vector<16x32xf32> to vector<16x8xf32>
    %304 = arith.truncf %303 : vector<16x8xf32> to vector<16x8xbf16>
    %305 = vector.extract_strided_slice %235 {offsets = [0, 24], sizes = [16, 8], strides = [1, 1]} : vector<16x32xf32> to vector<16x8xf32>
    %306 = arith.truncf %305 : vector<16x8xf32> to vector<16x8xbf16>
    %307 = vector.extract_strided_slice %236 {offsets = [0, 24], sizes = [16, 8], strides = [1, 1]} : vector<16x32xf32> to vector<16x8xf32>
    %308 = arith.truncf %307 : vector<16x8xf32> to vector<16x8xbf16>
    "tpu.trace_start"() <{level = 10 : i32, message = "qd,kd->qk"}> : () -> ()
    %cst_97 = arith.constant dense<0.000000e+00> : vector<16x16xf32>
    %309 = tpu.matmul %304, %306, %cst_97 {dimension_numbers = #tpu.dot_dimension_numbers<[1], [1], [0], [0], [0, 0, 1, 0], [], []>} : vector<16x8xbf16>, vector<16x8xbf16>, vector<16x16xf32> -> vector<16x16xf32>
    "tpu.trace_stop"() : () -> ()
    %cst_98 = arith.constant 0.353553385 : f32
    %310 = vector.broadcast %cst_98 : f32 to vector<16x16xf32>
    %311 = arith.mulf %309, %310 : vector<16x16xf32>
    %312 = arith.addf %311, %10 : vector<16x16xf32>
    %cst_99 = arith.constant dense<0xFF800000> : vector<16xf32>
    %313 = vector.multi_reduction <maximumf>, %312, %cst_99 [1] : vector<16x16xf32> to vector<16xf32>
    %314 = vector.shape_cast %313 : vector<16xf32> to vector<16x1xf32>
    %315 = vector.broadcast %314 : vector<16x1xf32> to vector<16x16xf32>
    %316 = arith.subf %312, %315 : vector<16x16xf32>
    %317 = math.exp %316 : vector<16x16xf32>
    %cst_100 = arith.constant dense<0.000000e+00> : vector<16xf32>
    %318 = vector.multi_reduction <add>, %317, %cst_100 [1] : vector<16x16xf32> to vector<16xf32>
    %319 = vector.shape_cast %318 : vector<16xf32> to vector<16x1xf32>
    %320 = tpu.reciprocal %319 {approx = true} : vector<16x1xf32> -> vector<16x1xf32>
    %321 = vector.broadcast %320 : vector<16x1xf32> to vector<16x16xf32>
    %322 = arith.mulf %317, %321 : vector<16x16xf32>
    %323 = arith.truncf %322 : vector<16x16xf32> to vector<16x16xbf16>
    %cst_101 = arith.constant dense<0.000000e+00> : vector<16x8xf32>
    %324 = tpu.matmul %323, %308, %cst_101 {dimension_numbers = #tpu.dot_dimension_numbers<[1], [0], [0], [1], [0, 0, 1, 1], [], []>} : vector<16x16xbf16>, vector<16x8xbf16>, vector<16x8xf32> -> vector<16x8xf32>
    %325 = tpu.concatenate %258, %280, %302, %324 in 1 : vector<16x8xf32>, vector<16x8xf32>, vector<16x8xf32>, vector<16x8xf32> -> vector<16x32xf32>
    %326 = vector.extract_strided_slice %190 {offsets = [0, 96], sizes = [32, 32], strides = [1, 1]} : vector<32x128xf32> to vector<32x32xf32>
    %327 = arith.truncf %325 : vector<16x32xf32> to vector<16x32xbf16>
    %328 = arith.truncf %326 : vector<32x32xf32> to vector<32x32xbf16>
    %cst_102 = arith.constant dense<0.000000e+00> : vector<16x32xf32>
    %329 = tpu.matmul %327, %328, %cst_102 {dimension_numbers = #tpu.dot_dimension_numbers<[1], [0], [0], [1], [0, 0, 1, 1], [], []>} : vector<16x32xbf16>, vector<32x32xbf16>, vector<16x32xf32> -> vector<16x32xf32>
    %330 = vector.broadcast %207 : vector<1x32xf32> to vector<16x32xf32>
    %331 = arith.addf %329, %330 : vector<16x32xf32>
    %332 = arith.addf %188, %331 : vector<16x32xf32>
    %cst_103 = arith.constant dense<0.000000e+00> : vector<16xf32>
    %333 = vector.multi_reduction <add>, %332, %cst_103 [1] : vector<16x32xf32> to vector<16xf32>
    %334 = vector.shape_cast %333 : vector<16xf32> to vector<16x1xf32>
    %cst_104 = arith.constant 3.200000e+01 : f32
    %335 = vector.broadcast %cst_104 : f32 to vector<16x1xf32>
    %336 = arith.divf %334, %335 : vector<16x1xf32>
    %337 = vector.broadcast %336 : vector<16x1xf32> to vector<16x32xf32>
    %338 = arith.subf %332, %337 : vector<16x32xf32>
    %339 = arith.mulf %338, %338 : vector<16x32xf32>
    %cst_105 = arith.constant dense<0.000000e+00> : vector<16xf32>
    %340 = vector.multi_reduction <add>, %339, %cst_105 [1] : vector<16x32xf32> to vector<16xf32>
    %341 = vector.shape_cast %340 : vector<16xf32> to vector<16x1xf32>
    %cst_106 = arith.constant 3.200000e+01 : f32
    %342 = vector.broadcast %cst_106 : f32 to vector<16x1xf32>
    %343 = arith.divf %341, %342 : vector<16x1xf32>
    %cst_107 = arith.constant 9.99999974E-6 : f32
    %344 = vector.broadcast %cst_107 : f32 to vector<16x1xf32>
    %345 = arith.addf %343, %344 : vector<16x1xf32>
    %346 = math.rsqrt %345 : vector<16x1xf32>
    %347 = vector.broadcast %346 : vector<16x1xf32> to vector<16x32xf32>
    %348 = arith.mulf %338, %347 : vector<16x32xf32>
    %349 = vector.broadcast %205 : vector<1x32xf32> to vector<16x32xf32>
    %350 = arith.mulf %348, %349 : vector<16x32xf32>
    %351 = vector.broadcast %206 : vector<1x32xf32> to vector<16x32xf32>
    %352 = arith.addf %350, %351 : vector<16x32xf32>
    %353 = arith.truncf %352 : vector<16x32xf32> to vector<16x32xbf16>
    %354 = arith.truncf %192 : vector<32x128xf32> to vector<32x128xbf16>
    %cst_108 = arith.constant dense<0.000000e+00> : vector<16x128xf32>
    %355 = tpu.matmul %353, %354, %cst_108 {dimension_numbers = #tpu.dot_dimension_numbers<[1], [0], [0], [1], [0, 0, 1, 1], [], []>} : vector<16x32xbf16>, vector<32x128xbf16>, vector<16x128xf32> -> vector<16x128xf32>
    %356 = vector.broadcast %198 : vector<1x128xf32> to vector<16x128xf32>
    %357 = arith.addf %355, %356 : vector<16x128xf32>
    %cst_109 = arith.constant 0.000000e+00 : f32
    %358 = vector.broadcast %cst_109 : f32 to vector<16x128xf32>
    %359 = arith.maximumf %357, %358 : vector<16x128xf32>
    %360 = arith.truncf %359 : vector<16x128xf32> to vector<16x128xbf16>
    %361 = arith.truncf %194 : vector<128x128xf32> to vector<128x128xbf16>
    %cst_110 = arith.constant dense<0.000000e+00> : vector<16x128xf32>
    %362 = tpu.matmul %360, %361, %cst_110 {dimension_numbers = #tpu.dot_dimension_numbers<[1], [0], [0], [1], [0, 0, 1, 1], [], []>} : vector<16x128xbf16>, vector<128x128xbf16>, vector<16x128xf32> -> vector<16x128xf32>
    %363 = vector.extract_strided_slice %362 {offsets = [0, 0], sizes = [16, 32], strides = [1, 1]} : vector<16x128xf32> to vector<16x32xf32>
    %364 = arith.addf %332, %363 : vector<16x32xf32>
    %365 = vector.broadcast %208 : vector<1x32xf32> to vector<16x32xf32>
    %366 = arith.addf %364, %365 : vector<16x32xf32>
    %c80 = arith.constant 80 : index
    %c0_111 = arith.constant 0 : index
    %367 = vector.load %arg2[%c80, %c0_111] : memref<136x128xf32, #tpu.memory_space<vmem>>, vector<32x128xf32>
    %c112 = arith.constant 112 : index
    %c0_112 = arith.constant 0 : index
    %368 = vector.load %arg2[%c112, %c0_112] : memref<136x128xf32, #tpu.memory_space<vmem>>, vector<1x128xf32>
    %369 = arith.truncf %366 : vector<16x32xf32> to vector<16x32xbf16>
    %370 = arith.truncf %367 : vector<32x128xf32> to vector<32x128xbf16>
    %cst_113 = arith.constant dense<0.000000e+00> : vector<16x128xf32>
    %371 = tpu.matmul %369, %370, %cst_113 {dimension_numbers = #tpu.dot_dimension_numbers<[1], [0], [0], [1], [0, 0, 1, 1], [], []>} : vector<16x32xbf16>, vector<32x128xbf16>, vector<16x128xf32> -> vector<16x128xf32>
    %372 = vector.broadcast %368 : vector<1x128xf32> to vector<16x128xf32>
    %373 = arith.addf %371, %372 : vector<16x128xf32>
    %c0_114 = arith.constant 0 : index
    %c0_115 = arith.constant 0 : index
    %374 = vector.load %arg4[%c0_114, %c0_115] : memref<16x128xf32, #tpu.memory_space<vmem>>, vector<16x128xf32>
    tpu.vector_store %arg4[%c0_114, %c0_115], %373 {strides = array<i32>} : memref<16x128xf32, #tpu.memory_space<vmem>>, vector<16x128xf32>,
    %375 = tpu.concatenate %57, %58, %235, %236 in 1 : vector<16x32xf32>, vector<16x32xf32>, vector<16x32xf32>, vector<16x32xf32> -> vector<16x128xf32>
    %c0_116 = arith.constant 0 : index
    %c0_117 = arith.constant 0 : index
    %376 = vector.load %arg5[%c0_116, %c0_117] : memref<16x128xf32, #tpu.memory_space<vmem>>, vector<16x128xf32>
    tpu.vector_store %arg5[%c0_116, %c0_117], %375 {strides = array<i32>} : memref<16x128xf32, #tpu.memory_space<vmem>>, vector<16x128xf32>,
    return
  }
  func.func @transform_0(%arg0: i32) -> (i32, i32) {
    %c0_i32 = arith.constant 0 : i32
    %c0_i32_0 = arith.constant 0 : i32
    %c0_i32_1 = arith.constant 0 : i32
    return %c0_i32, %c0_i32_0 : i32, i32
  }
  func.func @transform_1(%arg0: i32) -> (i32, i32) {
    %c0_i32 = arith.constant 0 : i32
    %c0_i32_0 = arith.constant 0 : i32
    %c0_i32_1 = arith.constant 0 : i32
    return %c0_i32, %c0_i32_0 : i32, i32
  }
  func.func @transform_2(%arg0: i32) -> (i32, i32, i32) {
    %c0_i32 = arith.constant 0 : i32
    %c0_i32_0 = arith.constant 0 : i32
    %c0_i32_1 = arith.constant 0 : i32
    %c0_i32_2 = arith.constant 0 : i32
    return %c0_i32, %c0_i32_0, %c0_i32_1 : i32, i32, i32
  }
  func.func @transform_3(%arg0: i32) -> (i32, i32) {
    %c0_i32 = arith.constant 0 : i32
    %c0_i32_0 = arith.constant 0 : i32
    %c0_i32_1 = arith.constant 0 : i32
    return %c0_i32, %c0_i32_0 : i32, i32
  }
  func.func @transform_4(%arg0: i32) -> (i32, i32) {
    %c0_i32 = arith.constant 0 : i32
    %c0_i32_0 = arith.constant 0 : i32
    %c0_i32_1 = arith.constant 0 : i32
    return %c0_i32, %c0_i32_0 : i32, i32
  }
}

</mosaic_0001>

<llo_original>
// kernel: tpu_custom_call.1
$region0: #{tpu_custom_call.1}
  #allocation0 [shape = 'u32[]', space=smem, size = 0x4, offset = 0x4, fixed_abs, tag = 'smem constant byte address 0x4 - core index']
  #allocation1 [shape = 'u32[144,128]{1,0:T(1,128)}', space=vmem, size = 0x12000, scoped, tag = 'internal scratch']
  %s0 = inlined_call_operand.vmem [shape: s32[16,1], index: 0, kind: input, shape index: {}]
  %s1 = inlined_call_operand.hbm [shape: f32[136,128], index: 1, kind: input, shape index: {}]
  %s2 = inlined_call_operand.hbm [shape: f32[2,200,128], index: 2, kind: input, shape index: {}]
  %s3 = inlined_call_operand.hbm [shape: f32[16,128], index: 3, kind: output, shape index: {0}]
  %s4 = inlined_call_operand.hbm [shape: f32[16,128], index: 4, kind: output, shape index: {1}]
  %5 = xla_tuple %s3, %s4
  %s6 = sld [smem:[#allocation0]]
  $region38: #{tpu_custom_call.1} parent=0
    _
  %s8 = ssub.s32 1, %s6
  %s9 = scalar_select 0, %s8, %s6
  $region1: #{tpu_custom_call.1} parent=0
    #allocation2 [shape = 'u8[69632]{0}', space=vmem, size = 0x11000, scoped, tag = 'input window, operand 1, single buffered']
    #allocation3 [shape = 's32[1]{0}', space=sflag, size = 0x4, scoped, tag = 'scoped memory for tpu_custom_call.1']
    #allocation4 [shape = 's32[1]{0}', space=sflag, size = 0x4, scoped, tag = 'scoped memory for tpu_custom_call.1']
    #allocation5 [shape = 'u8[204800]{0}', space=vmem, size = 0x32000, scoped, tag = 'input window, operand 2, single buffered']
    #allocation6 [shape = 's32[1]{0}', space=sflag, size = 0x4, scoped, tag = 'scoped memory for tpu_custom_call.1']
    #allocation7 [shape = 'u8[8192]{0}', space=vmem, size = 0x2000, scoped, tag = 'output window, operand 0, single buffered']
    #allocation8 [shape = 'u8[8192]{0}', space=vmem, size = 0x2000, scoped, tag = 'output window, operand 1, single buffered']
    #allocation9 [shape = 's32[1]{0}', space=sflag, size = 0x4, scoped, tag = 'scoped memory for tpu_custom_call.1']
    %10 = vsyncpa [#allocation3], 0
    %11 = vsyncpa [#allocation6], 0
    %12 = vsyncpa [#allocation4], 0
    %13 = vsyncpa [#allocation9], 0
    // Predicated region
    $region2: #{tpu_custom_call.1} parent=1 // pred_check
      _
    $region3: #{tpu_custom_call.1} parent=1 // pred_check_branch
      %15 = sbr.rel (0) target = $region5
    $region4: #{tpu_custom_call.1} parent=1 // pred_region
      _
    $region5: #{tpu_custom_call.1} parent=1 // pred_fallthru
      _
    // Predicated region
    $region6: #{tpu_custom_call.1} parent=1 // pred_check
      _
    $region7: #{tpu_custom_call.1} parent=1 // pred_check_branch
      %17 = sbr.rel (0) target = $region9
    $region8: #{tpu_custom_call.1} parent=1 // pred_region
      %s19 = ssub.s32 2176, 2176
      %20 = vsyncadd [#allocation3], %s19
      %s21 = sshll.u32 [#allocation2], 4
      %s22 = int_to_ptr.vmem [resolvable:$true] %s21
      %27 = dma.hbm_to_vmem [thread:$0]  %s1, 2176, %s22, [#allocation3], 128, 128, 8
    $region9: #{tpu_custom_call.1} parent=1 // pred_fallthru
      _
    // Predicated region
    $region10: #{tpu_custom_call.1} parent=1 // pred_check
      _
    $region11: #{tpu_custom_call.1} parent=1 // pred_check_branch
      %29 = sbr.rel (0) target = $region13
    $region12: #{tpu_custom_call.1} parent=1 // pred_region
      %s31 = ssub.s32 6400, 6400
      %32 = vsyncadd [#allocation6], %s31
      %s33 = sshll.u32 [#allocation5], 4
      %s34 = int_to_ptr.vmem [resolvable:$true] %s33
      %39 = dma.hbm_to_vmem [thread:$0]  %s2, 6400, %s34, [#allocation6], 128, 128, 8
    $region13: #{tpu_custom_call.1} parent=1 // pred_fallthru
      _
    // Predicated region
    $region14: #{tpu_custom_call.1} parent=1 // pred_check
      _
    $region15: #{tpu_custom_call.1} parent=1 // pred_check_branch
      %41 = sbr.rel (0) target = $region17
    $region16: #{tpu_custom_call.1} parent=1 // pred_region
      %42 = dma.done [#allocation3], 2176
    $region17: #{tpu_custom_call.1} parent=1 // pred_fallthru
      _
    // Predicated region
    $region18: #{tpu_custom_call.1} parent=1 // pred_check
      _
    $region19: #{tpu_custom_call.1} parent=1 // pred_check_branch
      %44 = sbr.rel (0) target = $region21
    $region20: #{tpu_custom_call.1} parent=1 // pred_region
      %45 = dma.done [#allocation6], 6400
    $region21: #{tpu_custom_call.1} parent=1 // pred_fallthru
      _
    %v47 = vld [vmem:[%s0] sm:$0xff]
    %v48 = vld [vmem:[%s0 + $0x8] sm:$0xff]
    %v49 = vlaneseq
    %v50 = vand.u32 %v49, 127
    %51 = vset.pattern.permute.xlu0 0
    %52 = vperm.xlu0 %51, %v47
    %v53 = vpop.permute.xlu0 %52
    %54 = vset.pattern.permute.xlu0 0
    %55 = vperm.xlu0 %54, %v48
    %v56 = vpop.permute.xlu0 %55
    %vm57 = vcmp.eq.s32.totalorder %v53, %v50
    %vm58 = vcmp.eq.s32.totalorder %v56, %v50
    %v59 = vsel %vm57, 1, 0
    %v60 = vsel %vm58, 1, 0
    %v61 = vcvt.s32.f32 %v59
    %v62 = vcvt.s32.f32 %v60
    %v63 = vld [vmem:[#allocation2] sm:$0xff]
    %v64 = vld [vmem:[#allocation2 + $0x8] sm:$0xff]
    %v65 = vld [vmem:[#allocation2 + $0x10] sm:$0xff]
    %v66 = vld [vmem:[#allocation2 + $0x18] sm:$0xff]
    %v67 = vld [vmem:[#allocation2 + $0x20] sm:$0xff]
    %v68 = vld [vmem:[#allocation2 + $0x28] sm:$0xff]
    %v69 = vld [vmem:[#allocation2 + $0x30] sm:$0xff]
    %v70 = vld [vmem:[#allocation2 + $0x38] sm:$0xff]
    %v71 = vld [vmem:[#allocation2 + $0x40] sm:$0xff]
    %v72 = vld [vmem:[#allocation2 + $0x48] sm:$0xff]
    %vm73 = vcmask 523264
    %v75 = vsel %vm73, %v61, 0
    %v78 = vsel %vm73, %v62, 0
    %80 = vmatprep.subr.mxu0 0.0
    %81 = vmatpush1.msra.mxu0 0.0
    %82 = vmatprep.subr.mxu0 0.0
    %83 = vmatpush1.msra.mxu0 0.0
    %84 = vmatprep.subr.mxu0 0.0
    %85 = vmatpush1.msra.mxu0 0.0
    %86 = vmatprep.subr.mxu0 0.0
    %87 = vmatpush1.msra.mxu0 0.0
    %88 = vmatprep.subr.mxu0 0.0
    %89 = vmatpush1.msra.mxu0 0.0
    %90 = vmatprep.subr.mxu0 0.0
    %91 = vmatpush1.msra.mxu0 0.0
    %92 = vmatprep.subr.mxu0 0.0
    %93 = vmatpush1.msra.mxu0 0.0
    %94 = vmatprep.subr.mxu0 0.0
    %95 = vmatpush1.msra.mxu0 0.0
    %96 = vmatprep.subr.mxu0 0.0
    %97 = vmatpush1.msra.mxu0 %v70
    %98 = vmatprep.subr.mxu0 0.0
    %99 = vmatpush1.msra.mxu0 %v69
    %100 = vmatprep.subr.mxu0 0.0
    %101 = vmatpush1.msra.mxu0 %v68
    %102 = vmatprep.subr.mxu0 0.0
    %103 = vmatpush1.msra.mxu0 %v67
    %104 = vmatprep.subr.mxu0 0.0
    %105 = vmatpush1.msra.mxu0 %v66
    %106 = vmatprep.subr.mxu0 0.0
    %107 = vmatpush1.msra.mxu0 %v65
    %108 = vmatprep.subr.mxu0 0.0
    %109 = vmatpush1.msra.mxu0 %v64
    %110 = vmatprep.subr.mxu0 0.0
    %111 = vmatpush1.msra.mxu0 %v63
    %112 = vmatprep.subr.mxu0 0.0
    %113 = vmatpush2.msra.mxu0 0.0
    %114 = vmatprep.subr.mxu0 0.0
    %115 = vmatpush2.msra.mxu0 0.0
    %116 = vmatprep.subr.mxu0 0.0
    %117 = vmatpush2.msra.mxu0 0.0
    %118 = vmatprep.subr.mxu0 0.0
    %119 = vmatpush2.msra.mxu0 0.0
    %120 = vmatprep.subr.mxu0 0.0
    %121 = vmatpush2.msra.mxu0 0.0
    %122 = vmatprep.subr.mxu0 0.0
    %123 = vmatpush2.msra.mxu0 0.0
    %124 = vmatprep.subr.mxu0 0.0
    %125 = vmatpush2.msra.mxu0 0.0
    %126 = vmatprep.subr.mxu0 0.0
    %127 = vmatpush2.msra.mxu0 0.0
    %128 = vmatprep.subr.mxu0 0.0
    %129 = vmatpush2.msra.mxu0 0.0
    %130 = vmatprep.subr.mxu0 0.0
    %131 = vmatpush2.msra.mxu0 0.0
    %132 = vmatprep.subr.mxu0 0.0
    %133 = vmatpush2.msra.mxu0 0.0
    %134 = vmatprep.subr.mxu0 0.0
    %135 = vmatpush2.msra.mxu0 0.0
    %136 = vmatprep.subr.mxu0 0.0
    %137 = vmatpush2.msra.mxu0 0.0
    %138 = vmatprep.subr.mxu0 0.0
    %139 = vmatpush2.msra.mxu0 0.0
    %140 = vmatprep.subr.mxu0 0.0
    %141 = vmatpush2.msra.mxu0 0.0
    %142 = vmatprep.subr.mxu0 0.0
    %143 = vmatpush2.msra.mxu0 0.0
    %144 = vmatprep.mubr.f32.mxu0 0.0
    %145 = vmatmul.mubr.f32.gmra.mxu0 %v75
    %v146 = vpop.f32.mrf.mxu0
    %v147 = vadd.f32 %v71, %v146
    %v148 = vpop.f32.mrf.mxu0
    %149 = vmatprep.mubr.f32.mxu0 0.0
    %150 = vmatmul.mubr.f32.gmra.mxu0 %v78
    %v151 = vpop.f32.mrf.mxu0
    %v152 = vadd.f32 %v72, %v151
    %v153 = vpop.f32.mrf.mxu0
    %154 = vdwg.mxu0
    %v155 = vld [vmem:[#allocation2 + $0x78] sm:$0xff]
    %v156 = vld [vmem:[#allocation2 + $0x80] sm:$0xff]
    %v157 = vld [vmem:[#allocation5] sm:$0xff]
    %v158 = vld [vmem:[#allocation5 + $0x8] sm:$0xff]
    %v159 = vld [vmem:[#allocation5 + $0x10] sm:$0xff]
    %v160 = vld [vmem:[#allocation5 + $0x18] sm:$0xff]
    %v161 = vld [vmem:[#allocation5 + $0x20] sm:$0xff]
    %v162 = vld [vmem:[#allocation5 + $0x28] sm:$0xff]
    %v163 = vld [vmem:[#allocation5 + $0x30] sm:$0xff]
    %v164 = vld [vmem:[#allocation5 + $0x38] sm:$0xff]
    %v165 = vld [vmem:[#allocation5 + $0x40] sm:$0xff]
    %v166 = vld [vmem:[#allocation5 + $0x48] sm:$0xff]
    %v167 = vld [vmem:[#allocation5 + $0x50] sm:$0xff]
    %v168 = vld [vmem:[#allocation5 + $0x58] sm:$0xff]
    %v169 = vld [vmem:[#allocation5 + $0x60] sm:$0xff]
    %v170 = vld [vmem:[#allocation5 + $0x68] sm:$0xff]
    %v171 = vld [vmem:[#allocation5 + $0x70] sm:$0xff]
    %v172 = vld [vmem:[#allocation5 + $0x78] sm:$0xff]
    %v173 = vld [vmem:[#allocation5 + $0x80] sm:$0xff]
    %v174 = vld [vmem:[#allocation5 + $0x88] sm:$0xff]
    %v175 = vld [vmem:[#allocation5 + $0x90] sm:$0xff]
    %v176 = vld [vmem:[#allocation5 + $0x98] sm:$0xff]
    %v177 = vld [vmem:[#allocation5 + $0xa0] sm:$0xff]
    %v178 = vld [vmem:[#allocation5 + $0xa8] sm:$0xff]
    %v179 = vld [vmem:[#allocation5 + $0xb0] sm:$0xff]
    %v180 = vld [vmem:[#allocation5 + $0xb8] sm:$0xff]
    %v181 = vld [vmem:[#allocation5 + $0xc0] sm:$0x1]
    %v182 = vld [vmem:[#allocation5 + $0xc1] sm:$0x1]
    %v183 = vld [vmem:[#allocation5 + $0xc2] sm:$0x1]
    %v184 = vld [vmem:[#allocation5 + $0xc3] sm:$0x1]
    %vm185 = vcmask 261120
    %v186 = vsel %vm185, %v147, 0.0
    %187 = vadd.xlane.f32.xlu0 %v186
    %v188 = vpop.xlane.xlu0 %187
    %v189 = vsel %vm185, %v152, 0.0
    %190 = vadd.xlane.f32.xlu0 %v189
    %v191 = vpop.xlane.xlu0 %190
    %v192 = vrcp.pop 32.0
    %v193 = vmul.f32 %v188, %v192
    %v194 = vmul.f32 %v191, %v192
    %v195 = vsub.f32 %v147, %v193
    %v196 = vsub.f32 %v152, %v194
    %v197 = vmul.f32 %v195, %v195
    %v198 = vmul.f32 %v196, %v196
    %v199 = vsel %vm185, %v197, 0.0
    %200 = vadd.xlane.f32.xlu0 %v199
    %v201 = vpop.xlane.xlu0 %200
    %v202 = vsel %vm185, %v198, 0.0
    %203 = vadd.xlane.f32.xlu0 %v202
    %v204 = vpop.xlane.xlu0 %203
    %v205 = vmul.f32 %v201, %v192
    %v206 = vmul.f32 %v204, %v192
    %v207 = vadd.f32 %v205, 1e-05
    %v208 = vadd.f32 %v206, 1e-05
    %v209 = vrsqrt.pop %v207
    %v210 = vrsqrt.pop %v208
    %v211 = vmul.f32 %v195, %v209
    %v212 = vmul.f32 %v196, %v210
    %v213 = vlaneseq
    %v214 = vshrl.u32 %v213, 7
    %v215 = vsub.s32 0, %v214
    %v216 = vrot.slane %v183, %v215
    %v217 = vmul.f32 %v211, %v216
    %v218 = vmul.f32 %v212, %v216
    %220 = vrot.lane.b32.xlu0 %v216, 96
    %v221 = vpop.permute.xlu0 %220
    %v223 = vadd.f32 %v217, %v221
    %v224 = vadd.f32 %v218, %v221
    %v225 = vpack.c.bf16 %v224, %v223
    %v226 = vpack.c.bf16 %v158, %v157
    %v227 = vpack.c.bf16 %v160, %v159
    %v228 = vlaneseq
    %v229 = vshrl.u32 %v228, 7
    %v230 = vsub.s32 0, %v229
    %v231 = vrot.slane %v181, %v230
    %v233 = vsel %vm185, %v225, 0
    %235 = vmatprep.subr.bf16.mxu0 0
    %236 = vmatpush1.bf16.msra.mxu0 0
    %237 = vmatprep.subr.bf16.mxu0 0
    %238 = vmatpush1.bf16.msra.mxu0 0
    %239 = vmatprep.subr.bf16.mxu0 0
    %240 = vmatpush1.bf16.msra.mxu0 0
    %241 = vmatprep.subr.bf16.mxu0 0
    %242 = vmatpush1.bf16.msra.mxu0 0
    %243 = vmatprep.subr.bf16.mxu0 0
    %244 = vmatpush1.bf16.msra.mxu0 0
    %245 = vmatprep.subr.bf16.mxu0 0
    %246 = vmatpush1.bf16.msra.mxu0 0
    %247 = vmatprep.subr.bf16.mxu0 0
    %248 = vmatpush1.bf16.msra.mxu0 %v227
    %249 = vmatprep.subr.bf16.mxu0 0
    %250 = vmatpush1.bf16.msra.mxu0 %v226
    %251 = vmatprep.subr.bf16.mxu0 0
    %252 = vmatpush2.bf16.msra.mxu0 0
    %253 = vmatprep.subr.bf16.mxu0 0
    %254 = vmatpush2.bf16.msra.mxu0 0
    %255 = vmatprep.subr.bf16.mxu0 0
    %256 = vmatpush2.bf16.msra.mxu0 0
    %257 = vmatprep.subr.bf16.mxu0 0
    %258 = vmatpush2.bf16.msra.mxu0 0
    %259 = vmatprep.subr.bf16.mxu0 0
    %260 = vmatpush2.bf16.msra.mxu0 0
    %261 = vmatprep.subr.bf16.mxu0 0
    %262 = vmatpush2.bf16.msra.mxu0 0
    %263 = vmatprep.subr.bf16.mxu0 0
    %264 = vmatpush2.bf16.msra.mxu0 0
    %265 = vmatprep.subr.bf16.mxu0 0
    %266 = vmatpush2.bf16.msra.mxu0 0
    %267 = vmatprep.mubr.bf16.mxu0 0
    %268 = vmatmul.mubr.bf16.gmra.mxu0 %v233
    %v269 = vpop.f32.mrf.mxu0
    %v270 = vadd.f32 %v231, %v269
    %v271 = vpop.f32.mrf.mxu0
    %v272 = vpop.f32.mrf.mxu0
    %v273 = vadd.f32 %v231, %v272
    %v274 = vpop.f32.mrf.mxu0
    %275 = vdwg.mxu0
    %v276 = vpack.c.bf16 %v273, %v270
    %278 = vrot.lane.b32.xlu0 %v276, 96
    %v279 = vpop.permute.xlu0 %278
    %vm280 = vcmask 64512
    %v282 = vsel %vm280, %v276, 0
    %v285 = vsel %vm280, %v279, 0
    %287 = vmatprep.subr.bf16.mxu0 0
    %288 = vmatpush1.bf16.xpose.msra.mxu0 0
    %289 = vmatprep.subr.bf16.mxu0 0
    %290 = vmatpush1.bf16.xpose.msra.mxu0 0
    %291 = vmatprep.subr.bf16.mxu0 0
    %292 = vmatpush1.bf16.xpose.msra.mxu0 0
    %293 = vmatprep.subr.bf16.mxu0 0
    %294 = vmatpush1.bf16.xpose.msra.mxu0 0
    %295 = vmatprep.subr.bf16.mxu0 0
    %296 = vmatpush1.bf16.xpose.msra.mxu0 0
    %297 = vmatprep.subr.bf16.mxu0 0
    %298 = vmatpush1.bf16.xpose.msra.mxu0 0
    %299 = vmatprep.subr.bf16.mxu0 0
    %300 = vmatpush1.bf16.xpose.msra.mxu0 0
    %301 = vmatprep.subr.bf16.mxu0 0
    %302 = vmatpush1.bf16.xpose.msra.mxu0 %v285
    %303 = vmatprep.subr.bf16.mxu0 0
    %304 = vmatpush2.bf16.xpose.msra.mxu0 0
    %305 = vmatprep.subr.bf16.mxu0 0
    %306 = vmatpush2.bf16.xpose.msra.mxu0 0
    %307 = vmatprep.subr.bf16.mxu0 0
    %308 = vmatpush2.bf16.xpose.msra.mxu0 0
    %309 = vmatprep.subr.bf16.mxu0 0
    %310 = vmatpush2.bf16.xpose.msra.mxu0 0
    %311 = vmatprep.subr.bf16.mxu0 0
    %312 = vmatpush2.bf16.xpose.msra.mxu0 0
    %313 = vmatprep.subr.bf16.mxu0 0
    %314 = vmatpush2.bf16.xpose.msra.mxu0 0
    %315 = vmatprep.subr.bf16.mxu0 0
    %316 = vmatpush2.bf16.xpose.msra.mxu0 0
    %317 = vmatprep.subr.bf16.mxu0 0
    %318 = vmatpush2.bf16.xpose.msra.mxu0 0
    %319 = vmatprep.mubr.bf16.mxu0 0
    %320 = vmatmul.mubr.bf16.gmra.mxu0 %v282
    %v321 = vpop.f32.mrf.mxu0
    %v322 = vadd.f32 0.0, %v321
    %v323 = vpop.f32.mrf.mxu0
    %v324 = vpop.f32.mrf.mxu0
    %v325 = vadd.f32 0.0, %v324
    %v326 = vpop.f32.mrf.mxu0
    %327 = vdwg.mxu0
    %v328 = vmul.f32 %v322, 0.35355338
    %v329 = vmul.f32 %v325, 0.35355338
    %v330 = vadd.f32 %v328, %v155
    %v331 = vadd.f32 %v329, %v156
    %vm332 = vcmask 130048
    %v333 = vsel %vm332, %v330, -inf
    %334 = vmax.xlane.f32.xlu0 %v333
    %v335 = vpop.xlane.xlu0 %334
    %v336 = vsel %vm332, %v331, -inf
    %337 = vmax.xlane.f32.xlu0 %v336
    %v338 = vpop.xlane.xlu0 %337
    %v339 = vsub.f32 %v330, %v335
    %v340 = vsub.f32 %v331, %v338
    %v341 = vmul.f32 %v339, 1.442695
    %v342 = vpow.pop %v341
    %v343 = vmul.f32 %v340, 1.442695
    %v344 = vpow.pop %v343
    %v345 = vsel %vm332, %v342, 0.0
    %346 = vadd.xlane.f32.xlu0 %v345
    %v347 = vpop.xlane.xlu0 %346
    %v348 = vsel %vm332, %v344, 0.0
    %349 = vadd.xlane.f32.xlu0 %v348
    %v350 = vpop.xlane.xlu0 %349
    %v351 = vrcp.pop %v347
    %v352 = vrcp.pop %v350
    %v353 = vmul.f32 %v342, %v351
    %v354 = vmul.f32 %v344, %v352
    %v355 = vpack.c.bf16 %v354, %v353
    %356 = vrot.lane.b32.xlu0 %v276, 64
    %v357 = vpop.permute.xlu0 %356
    %v360 = vsel %vm332, %v355, 0
    %362 = vmatprep.subr.bf16.mxu0 0
    %363 = vmatpush1.bf16.msra.mxu0 0
    %364 = vmatprep.subr.bf16.mxu0 0
    %365 = vmatpush1.bf16.msra.mxu0 0
    %366 = vmatprep.subr.bf16.mxu0 0
    %367 = vmatpush1.bf16.msra.mxu0 0
    %368 = vmatprep.subr.bf16.mxu0 0
    %369 = vmatpush1.bf16.msra.mxu0 0
    %370 = vmatprep.subr.bf16.mxu0 0
    %371 = vmatpush1.bf16.msra.mxu0 0
    %372 = vmatprep.subr.bf16.mxu0 0
    %373 = vmatpush1.bf16.msra.mxu0 0
    %374 = vmatprep.subr.bf16.mxu0 0
    %375 = vmatpush1.bf16.msra.mxu0 0
    %376 = vmatprep.subr.bf16.mxu0 0
    %377 = vmatpush1.bf16.msra.mxu0 %v357
    %378 = vmatprep.subr.bf16.mxu0 0
    %379 = vmatpush2.bf16.msra.mxu0 0
    %380 = vmatprep.subr.bf16.mxu0 0
    %381 = vmatpush2.bf16.msra.mxu0 0
    %382 = vmatprep.subr.bf16.mxu0 0
    %383 = vmatpush2.bf16.msra.mxu0 0
    %384 = vmatprep.subr.bf16.mxu0 0
    %385 = vmatpush2.bf16.msra.mxu0 0
    %386 = vmatprep.subr.bf16.mxu0 0
    %387 = vmatpush2.bf16.msra.mxu0 0
    %388 = vmatprep.subr.bf16.mxu0 0
    %389 = vmatpush2.bf16.msra.mxu0 0
    %390 = vmatprep.subr.bf16.mxu0 0
    %391 = vmatpush2.bf16.msra.mxu0 0
    %392 = vmatprep.subr.bf16.mxu0 0
    %393 = vmatpush2.bf16.msra.mxu0 0
    %394 = vmatprep.mubr.bf16.mxu0 0
    %395 = vmatmul.mubr.bf16.gmra.mxu0 %v360
    %v396 = vpop.f32.mrf.mxu0
    %v397 = vadd.f32 0.0, %v396
    %v398 = vpop.f32.mrf.mxu0
    %v399 = vpop.f32.mrf.mxu0
    %v400 = vadd.f32 0.0, %v399
    %v401 = vpop.f32.mrf.mxu0
    %402 = vdwg.mxu0
    %403 = vrot.lane.b32.xlu0 %v276, 120
    %v404 = vpop.permute.xlu0 %403
    %405 = vrot.lane.b32.xlu0 %v276, 88
    %v406 = vpop.permute.xlu0 %405
    %v408 = vsel %vm280, %v404, 0
    %v411 = vsel %vm280, %v406, 0
    %413 = vmatprep.subr.bf16.mxu0 0
    %414 = vmatpush1.bf16.xpose.msra.mxu0 0
    %415 = vmatprep.subr.bf16.mxu0 0
    %416 = vmatpush1.bf16.xpose.msra.mxu0 0
    %417 = vmatprep.subr.bf16.mxu0 0
    %418 = vmatpush1.bf16.xpose.msra.mxu0 0
    %419 = vmatprep.subr.bf16.mxu0 0
    %420 = vmatpush1.bf16.xpose.msra.mxu0 0
    %421 = vmatprep.subr.bf16.mxu0 0
    %422 = vmatpush1.bf16.xpose.msra.mxu0 0
    %423 = vmatprep.subr.bf16.mxu0 0
    %424 = vmatpush1.bf16.xpose.msra.mxu0 0
    %425 = vmatprep.subr.bf16.mxu0 0
    %426 = vmatpush1.bf16.xpose.msra.mxu0 0
    %427 = vmatprep.subr.bf16.mxu0 0
    %428 = vmatpush1.bf16.xpose.msra.mxu0 %v411
    %429 = vmatprep.subr.bf16.mxu0 0
    %430 = vmatpush2.bf16.xpose.msra.mxu0 0
    %431 = vmatprep.subr.bf16.mxu0 0
    %432 = vmatpush2.bf16.xpose.msra.mxu0 0
    %433 = vmatprep.subr.bf16.mxu0 0
    %434 = vmatpush2.bf16.xpose.msra.mxu0 0
    %435 = vmatprep.subr.bf16.mxu0 0
    %436 = vmatpush2.bf16.xpose.msra.mxu0 0
    %437 = vmatprep.subr.bf16.mxu0 0
    %438 = vmatpush2.bf16.xpose.msra.mxu0 0
    %439 = vmatprep.subr.bf16.mxu0 0
    %440 = vmatpush2.bf16.xpose.msra.mxu0 0
    %441 = vmatprep.subr.bf16.mxu0 0
    %442 = vmatpush2.bf16.xpose.msra.mxu0 0
    %443 = vmatprep.subr.bf16.mxu0 0
    %444 = vmatpush2.bf16.xpose.msra.mxu0 0
    %445 = vmatprep.mubr.bf16.mxu0 0
    %446 = vmatmul.mubr.bf16.gmra.mxu0 %v408
    %v447 = vpop.f32.mrf.mxu0
    %v448 = vadd.f32 0.0, %v447
    %v449 = vpop.f32.mrf.mxu0
    %v450 = vpop.f32.mrf.mxu0
    %v451 = vadd.f32 0.0, %v450
    %v452 = vpop.f32.mrf.mxu0
    %453 = vdwg.mxu0
    %v454 = vmul.f32 %v448, 0.35355338
    %v455 = vmul.f32 %v451, 0.35355338
    %v456 = vadd.f32 %v454, %v155
    %v457 = vadd.f32 %v455, %v156
    %v458 = vsel %vm332, %v456, -inf
    %459 = vmax.xlane.f32.xlu0 %v458
    %v460 = vpop.xlane.xlu0 %459
    %v461 = vsel %vm332, %v457, -inf
    %462 = vmax.xlane.f32.xlu0 %v461
    %v463 = vpop.xlane.xlu0 %462
    %v464 = vsub.f32 %v456, %v460
    %v465 = vsub.f32 %v457, %v463
    %v466 = vmul.f32 %v464, 1.442695
    %v467 = vpow.pop %v466
    %v468 = vmul.f32 %v465, 1.442695
    %v469 = vpow.pop %v468
    %v470 = vsel %vm332, %v467, 0.0
    %471 = vadd.xlane.f32.xlu0 %v470
    %v472 = vpop.xlane.xlu0 %471
    %v473 = vsel %vm332, %v469, 0.0
    %474 = vadd.xlane.f32.xlu0 %v473
    %v475 = vpop.xlane.xlu0 %474
    %v476 = vrcp.pop %v472
    %v477 = vrcp.pop %v475
    %v478 = vmul.f32 %v467, %v476
    %v479 = vmul.f32 %v469, %v477
    %v480 = vpack.c.bf16 %v479, %v478
    %481 = vrot.lane.b32.xlu0 %v276, 56
    %v482 = vpop.permute.xlu0 %481
    %v485 = vsel %vm332, %v480, 0
    %487 = vmatprep.subr.bf16.mxu0 0
    %488 = vmatpush1.bf16.msra.mxu0 0
    %489 = vmatprep.subr.bf16.mxu0 0
    %490 = vmatpush1.bf16.msra.mxu0 0
    %491 = vmatprep.subr.bf16.mxu0 0
    %492 = vmatpush1.bf16.msra.mxu0 0
    %493 = vmatprep.subr.bf16.mxu0 0
    %494 = vmatpush1.bf16.msra.mxu0 0
    %495 = vmatprep.subr.bf16.mxu0 0
    %496 = vmatpush1.bf16.msra.mxu0 0
    %497 = vmatprep.subr.bf16.mxu0 0
    %498 = vmatpush1.bf16.msra.mxu0 0
    %499 = vmatprep.subr.bf16.mxu0 0
    %500 = vmatpush1.bf16.msra.mxu0 0
    %501 = vmatprep.subr.bf16.mxu0 0
    %502 = vmatpush1.bf16.msra.mxu0 %v482
    %503 = vmatprep.subr.bf16.mxu0 0
    %504 = vmatpush2.bf16.msra.mxu0 0
    %505 = vmatprep.subr.bf16.mxu0 0
    %506 = vmatpush2.bf16.msra.mxu0 0
    %507 = vmatprep.subr.bf16.mxu0 0
    %508 = vmatpush2.bf16.msra.mxu0 0
    %509 = vmatprep.subr.bf16.mxu0 0
    %510 = vmatpush2.bf16.msra.mxu0 0
    %511 = vmatprep.subr.bf16.mxu0 0
    %512 = vmatpush2.bf16.msra.mxu0 0
    %513 = vmatprep.subr.bf16.mxu0 0
    %514 = vmatpush2.bf16.msra.mxu0 0
    %515 = vmatprep.subr.bf16.mxu0 0
    %516 = vmatpush2.bf16.msra.mxu0 0
    %517 = vmatprep.subr.bf16.mxu0 0
    %518 = vmatpush2.bf16.msra.mxu0 0
    %519 = vmatprep.mubr.bf16.mxu0 0
    %520 = vmatmul.mubr.bf16.gmra.mxu0 %v485
    %v521 = vpop.f32.mrf.mxu0
    %v522 = vadd.f32 0.0, %v521
    %v523 = vpop.f32.mrf.mxu0
    %v524 = vpop.f32.mrf.mxu0
    %v525 = vadd.f32 0.0, %v524
    %v526 = vpop.f32.mrf.mxu0
    %527 = vdwg.mxu0
    %528 = vrot.lane.b32.xlu0 %v276, 112
    %v529 = vpop.permute.xlu0 %528
    %530 = vrot.lane.b32.xlu0 %v276, 80
    %v531 = vpop.permute.xlu0 %530
    %v533 = vsel %vm280, %v529, 0
    %v536 = vsel %vm280, %v531, 0
    %538 = vmatprep.subr.bf16.mxu0 0
    %539 = vmatpush1.bf16.xpose.msra.mxu0 0
    %540 = vmatprep.subr.bf16.mxu0 0
    %541 = vmatpush1.bf16.xpose.msra.mxu0 0
    %542 = vmatprep.subr.bf16.mxu0 0
    %543 = vmatpush1.bf16.xpose.msra.mxu0 0
    %544 = vmatprep.subr.bf16.mxu0 0
    %545 = vmatpush1.bf16.xpose.msra.mxu0 0
    %546 = vmatprep.subr.bf16.mxu0 0
    %547 = vmatpush1.bf16.xpose.msra.mxu0 0
    %548 = vmatprep.subr.bf16.mxu0 0
    %549 = vmatpush1.bf16.xpose.msra.mxu0 0
    %550 = vmatprep.subr.bf16.mxu0 0
    %551 = vmatpush1.bf16.xpose.msra.mxu0 0
    %552 = vmatprep.subr.bf16.mxu0 0
    %553 = vmatpush1.bf16.xpose.msra.mxu0 %v536
    %554 = vmatprep.subr.bf16.mxu0 0
    %555 = vmatpush2.bf16.xpose.msra.mxu0 0
    %556 = vmatprep.subr.bf16.mxu0 0
    %557 = vmatpush2.bf16.xpose.msra.mxu0 0
    %558 = vmatprep.subr.bf16.mxu0 0
    %559 = vmatpush2.bf16.xpose.msra.mxu0 0
    %560 = vmatprep.subr.bf16.mxu0 0
    %561 = vmatpush2.bf16.xpose.msra.mxu0 0
    %562 = vmatprep.subr.bf16.mxu0 0
    %563 = vmatpush2.bf16.xpose.msra.mxu0 0
    %564 = vmatprep.subr.bf16.mxu0 0
    %565 = vmatpush2.bf16.xpose.msra.mxu0 0
    %566 = vmatprep.subr.bf16.mxu0 0
    %567 = vmatpush2.bf16.xpose.msra.mxu0 0
    %568 = vmatprep.subr.bf16.mxu0 0
    %569 = vmatpush2.bf16.xpose.msra.mxu0 0
    %570 = vmatprep.mubr.bf16.mxu0 0
    %571 = vmatmul.mubr.bf16.gmra.mxu0 %v533
    %v572 = vpop.f32.mrf.mxu0
    %v573 = vadd.f32 0.0, %v572
    %v574 = vpop.f32.mrf.mxu0
    %v575 = vpop.f32.mrf.mxu0
    %v576 = vadd.f32 0.0, %v575
    %v577 = vpop.f32.mrf.mxu0
    %578 = vdwg.mxu0
    %v579 = vmul.f32 %v573, 0.35355338
    %v580 = vmul.f32 %v576, 0.35355338
    %v581 = vadd.f32 %v579, %v155
    %v582 = vadd.f32 %v580, %v156
    %v583 = vsel %vm332, %v581, -inf
    %584 = vmax.xlane.f32.xlu0 %v583
    %v585 = vpop.xlane.xlu0 %584
    %v586 = vsel %vm332, %v582, -inf
    %587 = vmax.xlane.f32.xlu0 %v586
    %v588 = vpop.xlane.xlu0 %587
    %v589 = vsub.f32 %v581, %v585
    %v590 = vsub.f32 %v582, %v588
    %v591 = vmul.f32 %v589, 1.442695
    %v592 = vpow.pop %v591
    %v593 = vmul.f32 %v590, 1.442695
    %v594 = vpow.pop %v593
    %v595 = vsel %vm332, %v592, 0.0
    %596 = vadd.xlane.f32.xlu0 %v595
    %v597 = vpop.xlane.xlu0 %596
    %v598 = vsel %vm332, %v594, 0.0
    %599 = vadd.xlane.f32.xlu0 %v598
    %v600 = vpop.xlane.xlu0 %599
    %v601 = vrcp.pop %v597
    %v602 = vrcp.pop %v600
    %v603 = vmul.f32 %v592, %v601
    %v604 = vmul.f32 %v594, %v602
    %v605 = vpack.c.bf16 %v604, %v603
    %606 = vrot.lane.b32.xlu0 %v276, 48
    %v607 = vpop.permute.xlu0 %606
    %v610 = vsel %vm332, %v605, 0
    %612 = vmatprep.subr.bf16.mxu0 0
    %613 = vmatpush1.bf16.msra.mxu0 0
    %614 = vmatprep.subr.bf16.mxu0 0
    %615 = vmatpush1.bf16.msra.mxu0 0
    %616 = vmatprep.subr.bf16.mxu0 0
    %617 = vmatpush1.bf16.msra.mxu0 0
    %618 = vmatprep.subr.bf16.mxu0 0
    %619 = vmatpush1.bf16.msra.mxu0 0
    %620 = vmatprep.subr.bf16.mxu0 0
    %621 = vmatpush1.bf16.msra.mxu0 0
    %622 = vmatprep.subr.bf16.mxu0 0
    %623 = vmatpush1.bf16.msra.mxu0 0
    %624 = vmatprep.subr.bf16.mxu0 0
    %625 = vmatpush1.bf16.msra.mxu0 0
    %626 = vmatprep.subr.bf16.mxu0 0
    %627 = vmatpush1.bf16.msra.mxu0 %v607
    %628 = vmatprep.subr.bf16.mxu0 0
    %629 = vmatpush2.bf16.msra.mxu0 0
    %630 = vmatprep.subr.bf16.mxu0 0
    %631 = vmatpush2.bf16.msra.mxu0 0
    %632 = vmatprep.subr.bf16.mxu0 0
    %633 = vmatpush2.bf16.msra.mxu0 0
    %634 = vmatprep.subr.bf16.mxu0 0
    %635 = vmatpush2.bf16.msra.mxu0 0
    %636 = vmatprep.subr.bf16.mxu0 0
    %637 = vmatpush2.bf16.msra.mxu0 0
    %638 = vmatprep.subr.bf16.mxu0 0
    %639 = vmatpush2.bf16.msra.mxu0 0
    %640 = vmatprep.subr.bf16.mxu0 0
    %641 = vmatpush2.bf16.msra.mxu0 0
    %642 = vmatprep.subr.bf16.mxu0 0
    %643 = vmatpush2.bf16.msra.mxu0 0
    %644 = vmatprep.mubr.bf16.mxu0 0
    %645 = vmatmul.mubr.bf16.gmra.mxu0 %v610
    %v646 = vpop.f32.mrf.mxu0
    %v647 = vadd.f32 0.0, %v646
    %v648 = vpop.f32.mrf.mxu0
    %v649 = vpop.f32.mrf.mxu0
    %v650 = vadd.f32 0.0, %v649
    %v651 = vpop.f32.mrf.mxu0
    %652 = vdwg.mxu0
    %653 = vrot.lane.b32.xlu0 %v276, 104
    %v654 = vpop.permute.xlu0 %653
    %655 = vrot.lane.b32.xlu0 %v276, 72
    %v656 = vpop.permute.xlu0 %655
    %v658 = vsel %vm280, %v654, 0
    %v661 = vsel %vm280, %v656, 0
    %663 = vmatprep.subr.bf16.mxu0 0
    %664 = vmatpush1.bf16.xpose.msra.mxu0 0
    %665 = vmatprep.subr.bf16.mxu0 0
    %666 = vmatpush1.bf16.xpose.msra.mxu0 0
    %667 = vmatprep.subr.bf16.mxu0 0
    %668 = vmatpush1.bf16.xpose.msra.mxu0 0
    %669 = vmatprep.subr.bf16.mxu0 0
    %670 = vmatpush1.bf16.xpose.msra.mxu0 0
    %671 = vmatprep.subr.bf16.mxu0 0
    %672 = vmatpush1.bf16.xpose.msra.mxu0 0
    %673 = vmatprep.subr.bf16.mxu0 0
    %674 = vmatpush1.bf16.xpose.msra.mxu0 0
    %675 = vmatprep.subr.bf16.mxu0 0
    %676 = vmatpush1.bf16.xpose.msra.mxu0 0
    %677 = vmatprep.subr.bf16.mxu0 0
    %678 = vmatpush1.bf16.xpose.msra.mxu0 %v661
    %679 = vmatprep.subr.bf16.mxu0 0
    %680 = vmatpush2.bf16.xpose.msra.mxu0 0
    %681 = vmatprep.subr.bf16.mxu0 0
    %682 = vmatpush2.bf16.xpose.msra.mxu0 0
    %683 = vmatprep.subr.bf16.mxu0 0
    %684 = vmatpush2.bf16.xpose.msra.mxu0 0
    %685 = vmatprep.subr.bf16.mxu0 0
    %686 = vmatpush2.bf16.xpose.msra.mxu0 0
    %687 = vmatprep.subr.bf16.mxu0 0
    %688 = vmatpush2.bf16.xpose.msra.mxu0 0
    %689 = vmatprep.subr.bf16.mxu0 0
    %690 = vmatpush2.bf16.xpose.msra.mxu0 0
    %691 = vmatprep.subr.bf16.mxu0 0
    %692 = vmatpush2.bf16.xpose.msra.mxu0 0
    %693 = vmatprep.subr.bf16.mxu0 0
    %694 = vmatpush2.bf16.xpose.msra.mxu0 0
    %695 = vmatprep.mubr.bf16.mxu0 0
    %696 = vmatmul.mubr.bf16.gmra.mxu0 %v658
    %v697 = vpop.f32.mrf.mxu0
    %v698 = vadd.f32 0.0, %v697
    %v699 = vpop.f32.mrf.mxu0
    %v700 = vpop.f32.mrf.mxu0
    %v701 = vadd.f32 0.0, %v700
    %v702 = vpop.f32.mrf.mxu0
    %703 = vdwg.mxu0
    %v704 = vmul.f32 %v698, 0.35355338
    %v705 = vmul.f32 %v701, 0.35355338
    %v706 = vadd.f32 %v704, %v155
    %v707 = vadd.f32 %v705, %v156
    %v708 = vsel %vm332, %v706, -inf
    %709 = vmax.xlane.f32.xlu0 %v708
    %v710 = vpop.xlane.xlu0 %709
    %v711 = vsel %vm332, %v707, -inf
    %712 = vmax.xlane.f32.xlu0 %v711
    %v713 = vpop.xlane.xlu0 %712
    %v714 = vsub.f32 %v706, %v710
    %v715 = vsub.f32 %v707, %v713
    %v716 = vmul.f32 %v714, 1.442695
    %v717 = vpow.pop %v716
    %v718 = vmul.f32 %v715, 1.442695
    %v719 = vpow.pop %v718
    %v720 = vsel %vm332, %v717, 0.0
    %721 = vadd.xlane.f32.xlu0 %v720
    %v722 = vpop.xlane.xlu0 %721
    %v723 = vsel %vm332, %v719, 0.0
    %724 = vadd.xlane.f32.xlu0 %v723
    %v725 = vpop.xlane.xlu0 %724
    %v726 = vrcp.pop %v722
    %v727 = vrcp.pop %v725
    %v728 = vmul.f32 %v717, %v726
    %v729 = vmul.f32 %v719, %v727
    %v730 = vpack.c.bf16 %v729, %v728
    %731 = vrot.lane.b32.xlu0 %v276, 40
    %v732 = vpop.permute.xlu0 %731
    %v735 = vsel %vm332, %v730, 0
    %737 = vmatprep.subr.bf16.mxu0 0
    %738 = vmatpush1.bf16.msra.mxu0 0
    %739 = vmatprep.subr.bf16.mxu0 0
    %740 = vmatpush1.bf16.msra.mxu0 0
    %741 = vmatprep.subr.bf16.mxu0 0
    %742 = vmatpush1.bf16.msra.mxu0 0
    %743 = vmatprep.subr.bf16.mxu0 0
    %744 = vmatpush1.bf16.msra.mxu0 0
    %745 = vmatprep.subr.bf16.mxu0 0
    %746 = vmatpush1.bf16.msra.mxu0 0
    %747 = vmatprep.subr.bf16.mxu0 0
    %748 = vmatpush1.bf16.msra.mxu0 0
    %749 = vmatprep.subr.bf16.mxu0 0
    %750 = vmatpush1.bf16.msra.mxu0 0
    %751 = vmatprep.subr.bf16.mxu0 0
    %752 = vmatpush1.bf16.msra.mxu0 %v732
    %753 = vmatprep.subr.bf16.mxu0 0
    %754 = vmatpush2.bf16.msra.mxu0 0
    %755 = vmatprep.subr.bf16.mxu0 0
    %756 = vmatpush2.bf16.msra.mxu0 0
    %757 = vmatprep.subr.bf16.mxu0 0
    %758 = vmatpush2.bf16.msra.mxu0 0
    %759 = vmatprep.subr.bf16.mxu0 0
    %760 = vmatpush2.bf16.msra.mxu0 0
    %761 = vmatprep.subr.bf16.mxu0 0
    %762 = vmatpush2.bf16.msra.mxu0 0
    %763 = vmatprep.subr.bf16.mxu0 0
    %764 = vmatpush2.bf16.msra.mxu0 0
    %765 = vmatprep.subr.bf16.mxu0 0
    %766 = vmatpush2.bf16.msra.mxu0 0
    %767 = vmatprep.subr.bf16.mxu0 0
    %768 = vmatpush2.bf16.msra.mxu0 0
    %769 = vmatprep.mubr.bf16.mxu0 0
    %770 = vmatmul.mubr.bf16.gmra.mxu0 %v735
    %v771 = vpop.f32.mrf.mxu0
    %v772 = vadd.f32 0.0, %v771
    %v773 = vpop.f32.mrf.mxu0
    %v774 = vpop.f32.mrf.mxu0
    %v775 = vadd.f32 0.0, %v774
    %v776 = vpop.f32.mrf.mxu0
    %777 = vdwg.mxu0
    %780 = vrot.lane.b32.xlu0 %v522, 8
    %v781 = vpop.permute.xlu0 %780
    %782 = vrot.lane.b32.xlu0 %v525, 8
    %v783 = vpop.permute.xlu0 %782
    %788 = vrot.lane.b32.xlu0 %v647, 16
    %v789 = vpop.permute.xlu0 %788
    %790 = vrot.lane.b32.xlu0 %v650, 16
    %v791 = vpop.permute.xlu0 %790
    %796 = vrot.lane.b32.xlu0 %v772, 24
    %v797 = vpop.permute.xlu0 %796
    %798 = vrot.lane.b32.xlu0 %v775, 24
    %v799 = vpop.permute.xlu0 %798
    %v802 = vsel %vm280, %v397, %v781
    %v803 = vsel %vm280, %v400, %v783
    %v804 = vsel %vm332, %v802, %v789
    %v805 = vsel %vm332, %v803, %v791
    %vm806 = vcmask 195584
    %v807 = vsel %vm806, %v804, %v797
    %v808 = vsel %vm806, %v805, %v799
    %v809 = vpack.c.bf16 %v808, %v807
    %v810 = vlaneseq
    %v811 = vshrl.u32 %v810, 7
    %v812 = vsub.s32 0, %v811
    %v813 = vrot.slane %v184, %v812
    %816 = vrot.lane.b32.xlu0 %v226, 32
    %v817 = vpop.permute.xlu0 %816
    %818 = vrot.lane.b32.xlu0 %v227, 32
    %v819 = vpop.permute.xlu0 %818
    %v823 = vsel %vm185, %v809, 0
    %825 = vmatprep.subr.bf16.mxu0 0
    %826 = vmatpush1.bf16.msra.mxu0 0
    %827 = vmatprep.subr.bf16.mxu0 0
    %828 = vmatpush1.bf16.msra.mxu0 0
    %829 = vmatprep.subr.bf16.mxu0 0
    %830 = vmatpush1.bf16.msra.mxu0 0
    %831 = vmatprep.subr.bf16.mxu0 0
    %832 = vmatpush1.bf16.msra.mxu0 0
    %833 = vmatprep.subr.bf16.mxu0 0
    %834 = vmatpush1.bf16.msra.mxu0 0
    %835 = vmatprep.subr.bf16.mxu0 0
    %836 = vmatpush1.bf16.msra.mxu0 0
    %837 = vmatprep.subr.bf16.mxu0 0
    %838 = vmatpush1.bf16.msra.mxu0 %v819
    %839 = vmatprep.subr.bf16.mxu0 0
    %840 = vmatpush1.bf16.msra.mxu0 %v817
    %841 = vmatprep.subr.bf16.mxu0 0
    %842 = vmatpush2.bf16.msra.mxu0 0
    %843 = vmatprep.subr.bf16.mxu0 0
    %844 = vmatpush2.bf16.msra.mxu0 0
    %845 = vmatprep.subr.bf16.mxu0 0
    %846 = vmatpush2.bf16.msra.mxu0 0
    %847 = vmatprep.subr.bf16.mxu0 0
    %848 = vmatpush2.bf16.msra.mxu0 0
    %849 = vmatprep.subr.bf16.mxu0 0
    %850 = vmatpush2.bf16.msra.mxu0 0
    %851 = vmatprep.subr.bf16.mxu0 0
    %852 = vmatpush2.bf16.msra.mxu0 0
    %853 = vmatprep.subr.bf16.mxu0 0
    %854 = vmatpush2.bf16.msra.mxu0 0
    %855 = vmatprep.subr.bf16.mxu0 0
    %856 = vmatpush2.bf16.msra.mxu0 0
    %857 = vmatprep.mubr.bf16.mxu0 0
    %858 = vmatmul.mubr.bf16.gmra.mxu0 %v823
    %v859 = vpop.f32.mrf.mxu0
    %v860 = vadd.f32 %v813, %v859
    %v861 = vpop.f32.mrf.mxu0
    %v862 = vpop.f32.mrf.mxu0
    %v863 = vadd.f32 %v813, %v862
    %v864 = vpop.f32.mrf.mxu0
    %865 = vdwg.mxu0
    %v866 = vadd.f32 %v147, %v860
    %v867 = vadd.f32 %v152, %v863
    %v868 = vsel %vm185, %v866, 0.0
    %869 = vadd.xlane.f32.xlu0 %v868
    %v870 = vpop.xlane.xlu0 %869
    %v871 = vsel %vm185, %v867, 0.0
    %872 = vadd.xlane.f32.xlu0 %v871
    %v873 = vpop.xlane.xlu0 %872
    %v874 = vmul.f32 %v870, %v192
    %v875 = vmul.f32 %v873, %v192
    %v876 = vsub.f32 %v866, %v874
    %v877 = vsub.f32 %v867, %v875
    %v878 = vmul.f32 %v876, %v876
    %v879 = vmul.f32 %v877, %v877
    %v880 = vsel %vm185, %v878, 0.0
    %881 = vadd.xlane.f32.xlu0 %v880
    %v882 = vpop.xlane.xlu0 %881
    %v883 = vsel %vm185, %v879, 0.0
    %884 = vadd.xlane.f32.xlu0 %v883
    %v885 = vpop.xlane.xlu0 %884
    %v886 = vmul.f32 %v882, %v192
    %v887 = vmul.f32 %v885, %v192
    %v888 = vadd.f32 %v886, 1e-05
    %v889 = vadd.f32 %v887, 1e-05
    %v890 = vrsqrt.pop %v888
    %v891 = vrsqrt.pop %v889
    %v892 = vmul.f32 %v876, %v890
    %v893 = vmul.f32 %v877, %v891
    %894 = vrot.lane.b32.xlu0 %v216, 64
    %v895 = vpop.permute.xlu0 %894
    %v897 = vmul.f32 %v892, %v895
    %v898 = vmul.f32 %v893, %v895
    %899 = vrot.lane.b32.xlu0 %v216, 32
    %v900 = vpop.permute.xlu0 %899
    %v902 = vadd.f32 %v897, %v900
    %v903 = vadd.f32 %v898, %v900
    %v904 = vpack.c.bf16 %v903, %v902
    %v905 = vpack.c.bf16 %v162, %v161
    %v906 = vpack.c.bf16 %v164, %v163
    %v907 = vlaneseq
    %v908 = vshrl.u32 %v907, 7
    %v909 = vsub.s32 0, %v908
    %v910 = vrot.slane %v182, %v909
    %v912 = vsel %vm185, %v904, 0
    %914 = vmatprep.subr.bf16.mxu0 0
    %915 = vmatpush1.bf16.msra.mxu0 0
    %916 = vmatprep.subr.bf16.mxu0 0
    %917 = vmatpush1.bf16.msra.mxu0 0
    %918 = vmatprep.subr.bf16.mxu0 0
    %919 = vmatpush1.bf16.msra.mxu0 0
    %920 = vmatprep.subr.bf16.mxu0 0
    %921 = vmatpush1.bf16.msra.mxu0 0
    %922 = vmatprep.subr.bf16.mxu0 0
    %923 = vmatpush1.bf16.msra.mxu0 0
    %924 = vmatprep.subr.bf16.mxu0 0
    %925 = vmatpush1.bf16.msra.mxu0 0
    %926 = vmatprep.subr.bf16.mxu0 0
    %927 = vmatpush1.bf16.msra.mxu0 %v906
    %928 = vmatprep.subr.bf16.mxu0 0
    %929 = vmatpush1.bf16.msra.mxu0 %v905
    %930 = vmatprep.subr.bf16.mxu0 0
    %931 = vmatpush2.bf16.msra.mxu0 0
    %932 = vmatprep.subr.bf16.mxu0 0
    %933 = vmatpush2.bf16.msra.mxu0 0
    %934 = vmatprep.subr.bf16.mxu0 0
    %935 = vmatpush2.bf16.msra.mxu0 0
    %936 = vmatprep.subr.bf16.mxu0 0
    %937 = vmatpush2.bf16.msra.mxu0 0
    %938 = vmatprep.subr.bf16.mxu0 0
    %939 = vmatpush2.bf16.msra.mxu0 0
    %940 = vmatprep.subr.bf16.mxu0 0
    %941 = vmatpush2.bf16.msra.mxu0 0
    %942 = vmatprep.subr.bf16.mxu0 0
    %943 = vmatpush2.bf16.msra.mxu0 0
    %944 = vmatprep.subr.bf16.mxu0 0
    %945 = vmatpush2.bf16.msra.mxu0 0
    %946 = vmatprep.mubr.bf16.mxu0 0
    %947 = vmatmul.mubr.bf16.gmra.mxu0 %v912
    %v948 = vpop.f32.mrf.mxu0
    %v949 = vadd.f32 %v910, %v948
    %v950 = vpop.f32.mrf.mxu0
    %v951 = vpop.f32.mrf.mxu0
    %v952 = vadd.f32 %v910, %v951
    %v953 = vpop.f32.mrf.mxu0
    %954 = vdwg.mxu0
    %v955 = vmax.f32 %v949, 0.0
    %v956 = vmax.f32 %v952, 0.0
    %v957 = vpack.c.bf16 %v956, %v955
    %v958 = vpack.c.bf16 %v166, %v165
    %v959 = vpack.c.bf16 %v168, %v167
    %v960 = vpack.c.bf16 %v170, %v169
    %v961 = vpack.c.bf16 %v172, %v171
    %v962 = vpack.c.bf16 %v174, %v173
    %v963 = vpack.c.bf16 %v176, %v175
    %v964 = vpack.c.bf16 %v178, %v177
    %v965 = vpack.c.bf16 %v180, %v179
    %966 = vmatprep.subr.bf16.mxu0 0
    %967 = vmatpush1.bf16.msra.mxu0 %v965
    %968 = vmatprep.subr.bf16.mxu0 0
    %969 = vmatpush1.bf16.msra.mxu0 %v964
    %970 = vmatprep.subr.bf16.mxu0 0
    %971 = vmatpush1.bf16.msra.mxu0 %v963
    %972 = vmatprep.subr.bf16.mxu0 0
    %973 = vmatpush1.bf16.msra.mxu0 %v962
    %974 = vmatprep.subr.bf16.mxu0 0
    %975 = vmatpush1.bf16.msra.mxu0 %v961
    %976 = vmatprep.subr.bf16.mxu0 0
    %977 = vmatpush1.bf16.msra.mxu0 %v960
    %978 = vmatprep.subr.bf16.mxu0 0
    %979 = vmatpush1.bf16.msra.mxu0 %v959
    %980 = vmatprep.subr.bf16.mxu0 0
    %981 = vmatpush1.bf16.msra.mxu0 %v958
    %982 = vmatprep.subr.bf16.mxu0 0
    %983 = vmatpush2.bf16.msra.mxu0 0
    %984 = vmatprep.subr.bf16.mxu0 0
    %985 = vmatpush2.bf16.msra.mxu0 0
    %986 = vmatprep.subr.bf16.mxu0 0
    %987 = vmatpush2.bf16.msra.mxu0 0
    %988 = vmatprep.subr.bf16.mxu0 0
    %989 = vmatpush2.bf16.msra.mxu0 0
    %990 = vmatprep.subr.bf16.mxu0 0
    %991 = vmatpush2.bf16.msra.mxu0 0
    %992 = vmatprep.subr.bf16.mxu0 0
    %993 = vmatpush2.bf16.msra.mxu0 0
    %994 = vmatprep.subr.bf16.mxu0 0
    %995 = vmatpush2.bf16.msra.mxu0 0
    %996 = vmatprep.subr.bf16.mxu0 0
    %997 = vmatpush2.bf16.msra.mxu0 0
    %998 = vmatprep.mubr.bf16.mxu0 0
    %999 = vmatmul.mubr.bf16.gmra.mxu0 %v957
    %v1000 = vpop.f32.mrf.mxu0
    %v1001 = vadd.f32 0.0, %v1000
    %v1002 = vpop.f32.mrf.mxu0
    %v1003 = vpop.f32.mrf.mxu0
    %v1004 = vadd.f32 0.0, %v1003
    %v1005 = vpop.f32.mrf.mxu0
    %1006 = vdwg.mxu0
    %v1007 = vadd.f32 %v866, %v1001
    %v1008 = vadd.f32 %v867, %v1004
    %1010 = vrot.lane.b32.xlu0 %v813, 96
    %v1011 = vpop.permute.xlu0 %1010
    %v1013 = vadd.f32 %v1007, %v1011
    %v1014 = vadd.f32 %v1008, %v1011
    %s1015 = scalar_lea.vmem [#allocation5], 200
    %v1016 = vld [vmem:[%s1015] sm:$0xff]
    %v1017 = vld [vmem:[%s1015 + $0x8] sm:$0xff]
    %v1018 = vld [vmem:[%s1015 + $0x10] sm:$0xff]
    %v1019 = vld [vmem:[%s1015 + $0x18] sm:$0xff]
    %v1020 = vld [vmem:[%s1015 + $0x20] sm:$0xff]
    %v1021 = vld [vmem:[%s1015 + $0x28] sm:$0xff]
    %v1022 = vld [vmem:[%s1015 + $0x30] sm:$0xff]
    %v1023 = vld [vmem:[%s1015 + $0x38] sm:$0xff]
    %v1024 = vld [vmem:[%s1015 + $0x40] sm:$0xff]
    %v1025 = vld [vmem:[%s1015 + $0x48] sm:$0xff]
    %v1026 = vld [vmem:[%s1015 + $0x50] sm:$0xff]
    %v1027 = vld [vmem:[%s1015 + $0x58] sm:$0xff]
    %v1028 = vld [vmem:[%s1015 + $0x60] sm:$0xff]
    %v1029 = vld [vmem:[%s1015 + $0x68] sm:$0xff]
    %v1030 = vld [vmem:[%s1015 + $0x70] sm:$0xff]
    %v1031 = vld [vmem:[%s1015 + $0x78] sm:$0xff]
    %v1032 = vld [vmem:[%s1015 + $0x80] sm:$0xff]
    %v1033 = vld [vmem:[%s1015 + $0x88] sm:$0xff]
    %v1034 = vld [vmem:[%s1015 + $0x90] sm:$0xff]
    %v1035 = vld [vmem:[%s1015 + $0x98] sm:$0xff]
    %v1036 = vld [vmem:[%s1015 + $0xa0] sm:$0xff]
    %v1037 = vld [vmem:[%s1015 + $0xa8] sm:$0xff]
    %v1038 = vld [vmem:[%s1015 + $0xb0] sm:$0xff]
    %v1039 = vld [vmem:[%s1015 + $0xb8] sm:$0xff]
    %v1040 = vld [vmem:[%s1015 + $0xc0] sm:$0x1]
    %v1041 = vld [vmem:[%s1015 + $0xc1] sm:$0x1]
    %v1042 = vld [vmem:[%s1015 + $0xc2] sm:$0x1]
    %v1043 = vld [vmem:[%s1015 + $0xc3] sm:$0x1]
    %v1044 = vsel %vm185, %v1013, 0.0
    %1045 = vadd.xlane.f32.xlu0 %v1044
    %v1046 = vpop.xlane.xlu0 %1045
    %v1047 = vsel %vm185, %v1014, 0.0
    %1048 = vadd.xlane.f32.xlu0 %v1047
    %v1049 = vpop.xlane.xlu0 %1048
    %v1050 = vmul.f32 %v1046, %v192
    %v1051 = vmul.f32 %v1049, %v192
    %v1052 = vsub.f32 %v1013, %v1050
    %v1053 = vsub.f32 %v1014, %v1051
    %v1054 = vmul.f32 %v1052, %v1052
    %v1055 = vmul.f32 %v1053, %v1053
    %v1056 = vsel %vm185, %v1054, 0.0
    %1057 = vadd.xlane.f32.xlu0 %v1056
    %v1058 = vpop.xlane.xlu0 %1057
    %v1059 = vsel %vm185, %v1055, 0.0
    %1060 = vadd.xlane.f32.xlu0 %v1059
    %v1061 = vpop.xlane.xlu0 %1060
    %v1062 = vmul.f32 %v1058, %v192
    %v1063 = vmul.f32 %v1061, %v192
    %v1064 = vadd.f32 %v1062, 1e-05
    %v1065 = vadd.f32 %v1063, 1e-05
    %v1066 = vrsqrt.pop %v1064
    %v1067 = vrsqrt.pop %v1065
    %v1068 = vmul.f32 %v1052, %v1066
    %v1069 = vmul.f32 %v1053, %v1067
    %v1070 = vlaneseq
    %v1071 = vshrl.u32 %v1070, 7
    %v1072 = vsub.s32 0, %v1071
    %v1073 = vrot.slane %v1042, %v1072
    %v1074 = vmul.f32 %v1068, %v1073
    %v1075 = vmul.f32 %v1069, %v1073
    %1077 = vrot.lane.b32.xlu0 %v1073, 96
    %v1078 = vpop.permute.xlu0 %1077
    %v1080 = vadd.f32 %v1074, %v1078
    %v1081 = vadd.f32 %v1075, %v1078
    %v1082 = vpack.c.bf16 %v1081, %v1080
    %v1083 = vpack.c.bf16 %v1017, %v1016
    %v1084 = vpack.c.bf16 %v1019, %v1018
    %v1085 = vlaneseq
    %v1086 = vshrl.u32 %v1085, 7
    %v1087 = vsub.s32 0, %v1086
    %v1088 = vrot.slane %v1040, %v1087
    %v1090 = vsel %vm185, %v1082, 0
    %1092 = vmatprep.subr.bf16.mxu0 0
    %1093 = vmatpush1.bf16.msra.mxu0 0
    %1094 = vmatprep.subr.bf16.mxu0 0
    %1095 = vmatpush1.bf16.msra.mxu0 0
    %1096 = vmatprep.subr.bf16.mxu0 0
    %1097 = vmatpush1.bf16.msra.mxu0 0
    %1098 = vmatprep.subr.bf16.mxu0 0
    %1099 = vmatpush1.bf16.msra.mxu0 0
    %1100 = vmatprep.subr.bf16.mxu0 0
    %1101 = vmatpush1.bf16.msra.mxu0 0
    %1102 = vmatprep.subr.bf16.mxu0 0
    %1103 = vmatpush1.bf16.msra.mxu0 0
    %1104 = vmatprep.subr.bf16.mxu0 0
    %1105 = vmatpush1.bf16.msra.mxu0 %v1084
    %1106 = vmatprep.subr.bf16.mxu0 0
    %1107 = vmatpush1.bf16.msra.mxu0 %v1083
    %1108 = vmatprep.subr.bf16.mxu0 0
    %1109 = vmatpush2.bf16.msra.mxu0 0
    %1110 = vmatprep.subr.bf16.mxu0 0
    %1111 = vmatpush2.bf16.msra.mxu0 0
    %1112 = vmatprep.subr.bf16.mxu0 0
    %1113 = vmatpush2.bf16.msra.mxu0 0
    %1114 = vmatprep.subr.bf16.mxu0 0
    %1115 = vmatpush2.bf16.msra.mxu0 0
    %1116 = vmatprep.subr.bf16.mxu0 0
    %1117 = vmatpush2.bf16.msra.mxu0 0
    %1118 = vmatprep.subr.bf16.mxu0 0
    %1119 = vmatpush2.bf16.msra.mxu0 0
    %1120 = vmatprep.subr.bf16.mxu0 0
    %1121 = vmatpush2.bf16.msra.mxu0 0
    %1122 = vmatprep.subr.bf16.mxu0 0
    %1123 = vmatpush2.bf16.msra.mxu0 0
    %1124 = vmatprep.mubr.bf16.mxu0 0
    %1125 = vmatmul.mubr.bf16.gmra.mxu0 %v1090
    %v1126 = vpop.f32.mrf.mxu0
    %v1127 = vadd.f32 %v1088, %v1126
    %v1128 = vpop.f32.mrf.mxu0
    %v1129 = vpop.f32.mrf.mxu0
    %v1130 = vadd.f32 %v1088, %v1129
    %v1131 = vpop.f32.mrf.mxu0
    %1132 = vdwg.mxu0
    %v1133 = vpack.c.bf16 %v1130, %v1127
    %1135 = vrot.lane.b32.xlu0 %v1133, 96
    %v1136 = vpop.permute.xlu0 %1135
    %v1138 = vsel %vm280, %v1133, 0
    %v1141 = vsel %vm280, %v1136, 0
    %1143 = vmatprep.subr.bf16.mxu0 0
    %1144 = vmatpush1.bf16.xpose.msra.mxu0 0
    %1145 = vmatprep.subr.bf16.mxu0 0
    %1146 = vmatpush1.bf16.xpose.msra.mxu0 0
    %1147 = vmatprep.subr.bf16.mxu0 0
    %1148 = vmatpush1.bf16.xpose.msra.mxu0 0
    %1149 = vmatprep.subr.bf16.mxu0 0
    %1150 = vmatpush1.bf16.xpose.msra.mxu0 0
    %1151 = vmatprep.subr.bf16.mxu0 0
    %1152 = vmatpush1.bf16.xpose.msra.mxu0 0
    %1153 = vmatprep.subr.bf16.mxu0 0
    %1154 = vmatpush1.bf16.xpose.msra.mxu0 0
    %1155 = vmatprep.subr.bf16.mxu0 0
    %1156 = vmatpush1.bf16.xpose.msra.mxu0 0
    %1157 = vmatprep.subr.bf16.mxu0 0
    %1158 = vmatpush1.bf16.xpose.msra.mxu0 %v1141
    %1159 = vmatprep.subr.bf16.mxu0 0
    %1160 = vmatpush2.bf16.xpose.msra.mxu0 0
    %1161 = vmatprep.subr.bf16.mxu0 0
    %1162 = vmatpush2.bf16.xpose.msra.mxu0 0
    %1163 = vmatprep.subr.bf16.mxu0 0
    %1164 = vmatpush2.bf16.xpose.msra.mxu0 0
    %1165 = vmatprep.subr.bf16.mxu0 0
    %1166 = vmatpush2.bf16.xpose.msra.mxu0 0
    %1167 = vmatprep.subr.bf16.mxu0 0
    %1168 = vmatpush2.bf16.xpose.msra.mxu0 0
    %1169 = vmatprep.subr.bf16.mxu0 0
    %1170 = vmatpush2.bf16.xpose.msra.mxu0 0
    %1171 = vmatprep.subr.bf16.mxu0 0
    %1172 = vmatpush2.bf16.xpose.msra.mxu0 0
    %1173 = vmatprep.subr.bf16.mxu0 0
    %1174 = vmatpush2.bf16.xpose.msra.mxu0 0
    %1175 = vmatprep.mubr.bf16.mxu0 0
    %1176 = vmatmul.mubr.bf16.gmra.mxu0 %v1138
    %v1177 = vpop.f32.mrf.mxu0
    %v1178 = vadd.f32 0.0, %v1177
    %v1179 = vpop.f32.mrf.mxu0
    %v1180 = vpop.f32.mrf.mxu0
    %v1181 = vadd.f32 0.0, %v1180
    %v1182 = vpop.f32.mrf.mxu0
    %1183 = vdwg.mxu0
    %v1184 = vmul.f32 %v1178, 0.35355338
    %v1185 = vmul.f32 %v1181, 0.35355338
    %v1186 = vadd.f32 %v1184, %v155
    %v1187 = vadd.f32 %v1185, %v156
    %v1188 = vsel %vm332, %v1186, -inf
    %1189 = vmax.xlane.f32.xlu0 %v1188
    %v1190 = vpop.xlane.xlu0 %1189
    %v1191 = vsel %vm332, %v1187, -inf
    %1192 = vmax.xlane.f32.xlu0 %v1191
    %v1193 = vpop.xlane.xlu0 %1192
    %v1194 = vsub.f32 %v1186, %v1190
    %v1195 = vsub.f32 %v1187, %v1193
    %v1196 = vmul.f32 %v1194, 1.442695
    %v1197 = vpow.pop %v1196
    %v1198 = vmul.f32 %v1195, 1.442695
    %v1199 = vpow.pop %v1198
    %v1200 = vsel %vm332, %v1197, 0.0
    %1201 = vadd.xlane.f32.xlu0 %v1200
    %v1202 = vpop.xlane.xlu0 %1201
    %v1203 = vsel %vm332, %v1199, 0.0
    %1204 = vadd.xlane.f32.xlu0 %v1203
    %v1205 = vpop.xlane.xlu0 %1204
    %v1206 = vrcp.pop %v1202
    %v1207 = vrcp.pop %v1205
    %v1208 = vmul.f32 %v1197, %v1206
    %v1209 = vmul.f32 %v1199, %v1207
    %v1210 = vpack.c.bf16 %v1209, %v1208
    %1211 = vrot.lane.b32.xlu0 %v1133, 64
    %v1212 = vpop.permute.xlu0 %1211
    %v1215 = vsel %vm332, %v1210, 0
    %1217 = vmatprep.subr.bf16.mxu0 0
    %1218 = vmatpush1.bf16.msra.mxu0 0
    %1219 = vmatprep.subr.bf16.mxu0 0
    %1220 = vmatpush1.bf16.msra.mxu0 0
    %1221 = vmatprep.subr.bf16.mxu0 0
    %1222 = vmatpush1.bf16.msra.mxu0 0
    %1223 = vmatprep.subr.bf16.mxu0 0
    %1224 = vmatpush1.bf16.msra.mxu0 0
    %1225 = vmatprep.subr.bf16.mxu0 0
    %1226 = vmatpush1.bf16.msra.mxu0 0
    %1227 = vmatprep.subr.bf16.mxu0 0
    %1228 = vmatpush1.bf16.msra.mxu0 0
    %1229 = vmatprep.subr.bf16.mxu0 0
    %1230 = vmatpush1.bf16.msra.mxu0 0
    %1231 = vmatprep.subr.bf16.mxu0 0
    %1232 = vmatpush1.bf16.msra.mxu0 %v1212
    %1233 = vmatprep.subr.bf16.mxu0 0
    %1234 = vmatpush2.bf16.msra.mxu0 0
    %1235 = vmatprep.subr.bf16.mxu0 0
    %1236 = vmatpush2.bf16.msra.mxu0 0
    %1237 = vmatprep.subr.bf16.mxu0 0
    %1238 = vmatpush2.bf16.msra.mxu0 0
    %1239 = vmatprep.subr.bf16.mxu0 0
    %1240 = vmatpush2.bf16.msra.mxu0 0
    %1241 = vmatprep.subr.bf16.mxu0 0
    %1242 = vmatpush2.bf16.msra.mxu0 0
    %1243 = vmatprep.subr.bf16.mxu0 0
    %1244 = vmatpush2.bf16.msra.mxu0 0
    %1245 = vmatprep.subr.bf16.mxu0 0
    %1246 = vmatpush2.bf16.msra.mxu0 0
    %1247 = vmatprep.subr.bf16.mxu0 0
    %1248 = vmatpush2.bf16.msra.mxu0 0
    %1249 = vmatprep.mubr.bf16.mxu0 0
    %1250 = vmatmul.mubr.bf16.gmra.mxu0 %v1215
    %v1251 = vpop.f32.mrf.mxu0
    %v1252 = vadd.f32 0.0, %v1251
    %v1253 = vpop.f32.mrf.mxu0
    %v1254 = vpop.f32.mrf.mxu0
    %v1255 = vadd.f32 0.0, %v1254
    %v1256 = vpop.f32.mrf.mxu0
    %1257 = vdwg.mxu0
    %1258 = vrot.lane.b32.xlu0 %v1133, 120
    %v1259 = vpop.permute.xlu0 %1258
    %1260 = vrot.lane.b32.xlu0 %v1133, 88
    %v1261 = vpop.permute.xlu0 %1260
    %v1263 = vsel %vm280, %v1259, 0
    %v1266 = vsel %vm280, %v1261, 0
    %1268 = vmatprep.subr.bf16.mxu0 0
    %1269 = vmatpush1.bf16.xpose.msra.mxu0 0
    %1270 = vmatprep.subr.bf16.mxu0 0
    %1271 = vmatpush1.bf16.xpose.msra.mxu0 0
    %1272 = vmatprep.subr.bf16.mxu0 0
    %1273 = vmatpush1.bf16.xpose.msra.mxu0 0
    %1274 = vmatprep.subr.bf16.mxu0 0
    %1275 = vmatpush1.bf16.xpose.msra.mxu0 0
    %1276 = vmatprep.subr.bf16.mxu0 0
    %1277 = vmatpush1.bf16.xpose.msra.mxu0 0
    %1278 = vmatprep.subr.bf16.mxu0 0
    %1279 = vmatpush1.bf16.xpose.msra.mxu0 0
    %1280 = vmatprep.subr.bf16.mxu0 0
    %1281 = vmatpush1.bf16.xpose.msra.mxu0 0
    %1282 = vmatprep.subr.bf16.mxu0 0
    %1283 = vmatpush1.bf16.xpose.msra.mxu0 %v1266
    %1284 = vmatprep.subr.bf16.mxu0 0
    %1285 = vmatpush2.bf16.xpose.msra.mxu0 0
    %1286 = vmatprep.subr.bf16.mxu0 0
    %1287 = vmatpush2.bf16.xpose.msra.mxu0 0
    %1288 = vmatprep.subr.bf16.mxu0 0
    %1289 = vmatpush2.bf16.xpose.msra.mxu0 0
    %1290 = vmatprep.subr.bf16.mxu0 0
    %1291 = vmatpush2.bf16.xpose.msra.mxu0 0
    %1292 = vmatprep.subr.bf16.mxu0 0
    %1293 = vmatpush2.bf16.xpose.msra.mxu0 0
    %1294 = vmatprep.subr.bf16.mxu0 0
    %1295 = vmatpush2.bf16.xpose.msra.mxu0 0
    %1296 = vmatprep.subr.bf16.mxu0 0
    %1297 = vmatpush2.bf16.xpose.msra.mxu0 0
    %1298 = vmatprep.subr.bf16.mxu0 0
    %1299 = vmatpush2.bf16.xpose.msra.mxu0 0
    %1300 = vmatprep.mubr.bf16.mxu0 0
    %1301 = vmatmul.mubr.bf16.gmra.mxu0 %v1263
    %v1302 = vpop.f32.mrf.mxu0
    %v1303 = vadd.f32 0.0, %v1302
    %v1304 = vpop.f32.mrf.mxu0
    %v1305 = vpop.f32.mrf.mxu0
    %v1306 = vadd.f32 0.0, %v1305
    %v1307 = vpop.f32.mrf.mxu0
    %1308 = vdwg.mxu0
    %v1309 = vmul.f32 %v1303, 0.35355338
    %v1310 = vmul.f32 %v1306, 0.35355338
    %v1311 = vadd.f32 %v1309, %v155
    %v1312 = vadd.f32 %v1310, %v156
    %v1313 = vsel %vm332, %v1311, -inf
    %1314 = vmax.xlane.f32.xlu0 %v1313
    %v1315 = vpop.xlane.xlu0 %1314
    %v1316 = vsel %vm332, %v1312, -inf
    %1317 = vmax.xlane.f32.xlu0 %v1316
    %v1318 = vpop.xlane.xlu0 %1317
    %v1319 = vsub.f32 %v1311, %v1315
    %v1320 = vsub.f32 %v1312, %v1318
    %v1321 = vmul.f32 %v1319, 1.442695
    %v1322 = vpow.pop %v1321
    %v1323 = vmul.f32 %v1320, 1.442695
    %v1324 = vpow.pop %v1323
    %v1325 = vsel %vm332, %v1322, 0.0
    %1326 = vadd.xlane.f32.xlu0 %v1325
    %v1327 = vpop.xlane.xlu0 %1326
    %v1328 = vsel %vm332, %v1324, 0.0
    %1329 = vadd.xlane.f32.xlu0 %v1328
    %v1330 = vpop.xlane.xlu0 %1329
    %v1331 = vrcp.pop %v1327
    %v1332 = vrcp.pop %v1330
    %v1333 = vmul.f32 %v1322, %v1331
    %v1334 = vmul.f32 %v1324, %v1332
    %v1335 = vpack.c.bf16 %v1334, %v1333
    %1336 = vrot.lane.b32.xlu0 %v1133, 56
    %v1337 = vpop.permute.xlu0 %1336
    %v1340 = vsel %vm332, %v1335, 0
    %1342 = vmatprep.subr.bf16.mxu0 0
    %1343 = vmatpush1.bf16.msra.mxu0 0
    %1344 = vmatprep.subr.bf16.mxu0 0
    %1345 = vmatpush1.bf16.msra.mxu0 0
    %1346 = vmatprep.subr.bf16.mxu0 0
    %1347 = vmatpush1.bf16.msra.mxu0 0
    %1348 = vmatprep.subr.bf16.mxu0 0
    %1349 = vmatpush1.bf16.msra.mxu0 0
    %1350 = vmatprep.subr.bf16.mxu0 0
    %1351 = vmatpush1.bf16.msra.mxu0 0
    %1352 = vmatprep.subr.bf16.mxu0 0
    %1353 = vmatpush1.bf16.msra.mxu0 0
    %1354 = vmatprep.subr.bf16.mxu0 0
    %1355 = vmatpush1.bf16.msra.mxu0 0
    %1356 = vmatprep.subr.bf16.mxu0 0
    %1357 = vmatpush1.bf16.msra.mxu0 %v1337
    %1358 = vmatprep.subr.bf16.mxu0 0
    %1359 = vmatpush2.bf16.msra.mxu0 0
    %1360 = vmatprep.subr.bf16.mxu0 0
    %1361 = vmatpush2.bf16.msra.mxu0 0
    %1362 = vmatprep.subr.bf16.mxu0 0
    %1363 = vmatpush2.bf16.msra.mxu0 0
    %1364 = vmatprep.subr.bf16.mxu0 0
    %1365 = vmatpush2.bf16.msra.mxu0 0
    %1366 = vmatprep.subr.bf16.mxu0 0
    %1367 = vmatpush2.bf16.msra.mxu0 0
    %1368 = vmatprep.subr.bf16.mxu0 0
    %1369 = vmatpush2.bf16.msra.mxu0 0
    %1370 = vmatprep.subr.bf16.mxu0 0
    %1371 = vmatpush2.bf16.msra.mxu0 0
    %1372 = vmatprep.subr.bf16.mxu0 0
    %1373 = vmatpush2.bf16.msra.mxu0 0
    %1374 = vmatprep.mubr.bf16.mxu0 0
    %1375 = vmatmul.mubr.bf16.gmra.mxu0 %v1340
    %v1376 = vpop.f32.mrf.mxu0
    %v1377 = vadd.f32 0.0, %v1376
    %v1378 = vpop.f32.mrf.mxu0
    %v1379 = vpop.f32.mrf.mxu0
    %v1380 = vadd.f32 0.0, %v1379
    %v1381 = vpop.f32.mrf.mxu0
    %1382 = vdwg.mxu0
    %1383 = vrot.lane.b32.xlu0 %v1133, 112
    %v1384 = vpop.permute.xlu0 %1383
    %1385 = vrot.lane.b32.xlu0 %v1133, 80
    %v1386 = vpop.permute.xlu0 %1385
    %v1388 = vsel %vm280, %v1384, 0
    %v1391 = vsel %vm280, %v1386, 0
    %1393 = vmatprep.subr.bf16.mxu0 0
    %1394 = vmatpush1.bf16.xpose.msra.mxu0 0
    %1395 = vmatprep.subr.bf16.mxu0 0
    %1396 = vmatpush1.bf16.xpose.msra.mxu0 0
    %1397 = vmatprep.subr.bf16.mxu0 0
    %1398 = vmatpush1.bf16.xpose.msra.mxu0 0
    %1399 = vmatprep.subr.bf16.mxu0 0
    %1400 = vmatpush1.bf16.xpose.msra.mxu0 0
    %1401 = vmatprep.subr.bf16.mxu0 0
    %1402 = vmatpush1.bf16.xpose.msra.mxu0 0
    %1403 = vmatprep.subr.bf16.mxu0 0
    %1404 = vmatpush1.bf16.xpose.msra.mxu0 0
    %1405 = vmatprep.subr.bf16.mxu0 0
    %1406 = vmatpush1.bf16.xpose.msra.mxu0 0
    %1407 = vmatprep.subr.bf16.mxu0 0
    %1408 = vmatpush1.bf16.xpose.msra.mxu0 %v1391
    %1409 = vmatprep.subr.bf16.mxu0 0
    %1410 = vmatpush2.bf16.xpose.msra.mxu0 0
    %1411 = vmatprep.subr.bf16.mxu0 0
    %1412 = vmatpush2.bf16.xpose.msra.mxu0 0
    %1413 = vmatprep.subr.bf16.mxu0 0
    %1414 = vmatpush2.bf16.xpose.msra.mxu0 0
    %1415 = vmatprep.subr.bf16.mxu0 0
    %1416 = vmatpush2.bf16.xpose.msra.mxu0 0
    %1417 = vmatprep.subr.bf16.mxu0 0
    %1418 = vmatpush2.bf16.xpose.msra.mxu0 0
    %1419 = vmatprep.subr.bf16.mxu0 0
    %1420 = vmatpush2.bf16.xpose.msra.mxu0 0
    %1421 = vmatprep.subr.bf16.mxu0 0
    %1422 = vmatpush2.bf16.xpose.msra.mxu0 0
    %1423 = vmatprep.subr.bf16.mxu0 0
    %1424 = vmatpush2.bf16.xpose.msra.mxu0 0
    %1425 = vmatprep.mubr.bf16.mxu0 0
    %1426 = vmatmul.mubr.bf16.gmra.mxu0 %v1388
    %v1427 = vpop.f32.mrf.mxu0
    %v1428 = vadd.f32 0.0, %v1427
    %v1429 = vpop.f32.mrf.mxu0
    %v1430 = vpop.f32.mrf.mxu0
    %v1431 = vadd.f32 0.0, %v1430
    %v1432 = vpop.f32.mrf.mxu0
    %1433 = vdwg.mxu0
    %v1434 = vmul.f32 %v1428, 0.35355338
    %v1435 = vmul.f32 %v1431, 0.35355338
    %v1436 = vadd.f32 %v1434, %v155
    %v1437 = vadd.f32 %v1435, %v156
    %v1438 = vsel %vm332, %v1436, -inf
    %1439 = vmax.xlane.f32.xlu0 %v1438
    %v1440 = vpop.xlane.xlu0 %1439
    %v1441 = vsel %vm332, %v1437, -inf
    %1442 = vmax.xlane.f32.xlu0 %v1441
    %v1443 = vpop.xlane.xlu0 %1442
    %v1444 = vsub.f32 %v1436, %v1440
    %v1445 = vsub.f32 %v1437, %v1443
    %v1446 = vmul.f32 %v1444, 1.442695
    %v1447 = vpow.pop %v1446
    %v1448 = vmul.f32 %v1445, 1.442695
    %v1449 = vpow.pop %v1448
    %v1450 = vsel %vm332, %v1447, 0.0
    %1451 = vadd.xlane.f32.xlu0 %v1450
    %v1452 = vpop.xlane.xlu0 %1451
    %v1453 = vsel %vm332, %v1449, 0.0
    %1454 = vadd.xlane.f32.xlu0 %v1453
    %v1455 = vpop.xlane.xlu0 %1454
    %v1456 = vrcp.pop %v1452
    %v1457 = vrcp.pop %v1455
    %v1458 = vmul.f32 %v1447, %v1456
    %v1459 = vmul.f32 %v1449, %v1457
    %v1460 = vpack.c.bf16 %v1459, %v1458
    %1461 = vrot.lane.b32.xlu0 %v1133, 48
    %v1462 = vpop.permute.xlu0 %1461
    %v1465 = vsel %vm332, %v1460, 0
    %1467 = vmatprep.subr.bf16.mxu0 0
    %1468 = vmatpush1.bf16.msra.mxu0 0
    %1469 = vmatprep.subr.bf16.mxu0 0
    %1470 = vmatpush1.bf16.msra.mxu0 0
    %1471 = vmatprep.subr.bf16.mxu0 0
    %1472 = vmatpush1.bf16.msra.mxu0 0
    %1473 = vmatprep.subr.bf16.mxu0 0
    %1474 = vmatpush1.bf16.msra.mxu0 0
    %1475 = vmatprep.subr.bf16.mxu0 0
    %1476 = vmatpush1.bf16.msra.mxu0 0
    %1477 = vmatprep.subr.bf16.mxu0 0
    %1478 = vmatpush1.bf16.msra.mxu0 0
    %1479 = vmatprep.subr.bf16.mxu0 0
    %1480 = vmatpush1.bf16.msra.mxu0 0
    %1481 = vmatprep.subr.bf16.mxu0 0
    %1482 = vmatpush1.bf16.msra.mxu0 %v1462
    %1483 = vmatprep.subr.bf16.mxu0 0
    %1484 = vmatpush2.bf16.msra.mxu0 0
    %1485 = vmatprep.subr.bf16.mxu0 0
    %1486 = vmatpush2.bf16.msra.mxu0 0
    %1487 = vmatprep.subr.bf16.mxu0 0
    %1488 = vmatpush2.bf16.msra.mxu0 0
    %1489 = vmatprep.subr.bf16.mxu0 0
    %1490 = vmatpush2.bf16.msra.mxu0 0
    %1491 = vmatprep.subr.bf16.mxu0 0
    %1492 = vmatpush2.bf16.msra.mxu0 0
    %1493 = vmatprep.subr.bf16.mxu0 0
    %1494 = vmatpush2.bf16.msra.mxu0 0
    %1495 = vmatprep.subr.bf16.mxu0 0
    %1496 = vmatpush2.bf16.msra.mxu0 0
    %1497 = vmatprep.subr.bf16.mxu0 0
    %1498 = vmatpush2.bf16.msra.mxu0 0
    %1499 = vmatprep.mubr.bf16.mxu0 0
    %1500 = vmatmul.mubr.bf16.gmra.mxu0 %v1465
    %v1501 = vpop.f32.mrf.mxu0
    %v1502 = vadd.f32 0.0, %v1501
    %v1503 = vpop.f32.mrf.mxu0
    %v1504 = vpop.f32.mrf.mxu0
    %v1505 = vadd.f32 0.0, %v1504
    %v1506 = vpop.f32.mrf.mxu0
    %1507 = vdwg.mxu0
    %1508 = vrot.lane.b32.xlu0 %v1133, 104
    %v1509 = vpop.permute.xlu0 %1508
    %1510 = vrot.lane.b32.xlu0 %v1133, 72
    %v1511 = vpop.permute.xlu0 %1510
    %v1513 = vsel %vm280, %v1509, 0
    %v1516 = vsel %vm280, %v1511, 0
    %1518 = vmatprep.subr.bf16.mxu0 0
    %1519 = vmatpush1.bf16.xpose.msra.mxu0 0
    %1520 = vmatprep.subr.bf16.mxu0 0
    %1521 = vmatpush1.bf16.xpose.msra.mxu0 0
    %1522 = vmatprep.subr.bf16.mxu0 0
    %1523 = vmatpush1.bf16.xpose.msra.mxu0 0
    %1524 = vmatprep.subr.bf16.mxu0 0
    %1525 = vmatpush1.bf16.xpose.msra.mxu0 0
    %1526 = vmatprep.subr.bf16.mxu0 0
    %1527 = vmatpush1.bf16.xpose.msra.mxu0 0
    %1528 = vmatprep.subr.bf16.mxu0 0
    %1529 = vmatpush1.bf16.xpose.msra.mxu0 0
    %1530 = vmatprep.subr.bf16.mxu0 0
    %1531 = vmatpush1.bf16.xpose.msra.mxu0 0
    %1532 = vmatprep.subr.bf16.mxu0 0
    %1533 = vmatpush1.bf16.xpose.msra.mxu0 %v1516
    %1534 = vmatprep.subr.bf16.mxu0 0
    %1535 = vmatpush2.bf16.xpose.msra.mxu0 0
    %1536 = vmatprep.subr.bf16.mxu0 0
    %1537 = vmatpush2.bf16.xpose.msra.mxu0 0
    %1538 = vmatprep.subr.bf16.mxu0 0
    %1539 = vmatpush2.bf16.xpose.msra.mxu0 0
    %1540 = vmatprep.subr.bf16.mxu0 0
    %1541 = vmatpush2.bf16.xpose.msra.mxu0 0
    %1542 = vmatprep.subr.bf16.mxu0 0
    %1543 = vmatpush2.bf16.xpose.msra.mxu0 0
    %1544 = vmatprep.subr.bf16.mxu0 0
    %1545 = vmatpush2.bf16.xpose.msra.mxu0 0
    %1546 = vmatprep.subr.bf16.mxu0 0
    %1547 = vmatpush2.bf16.xpose.msra.mxu0 0
    %1548 = vmatprep.subr.bf16.mxu0 0
    %1549 = vmatpush2.bf16.xpose.msra.mxu0 0
    %1550 = vmatprep.mubr.bf16.mxu0 0
    %1551 = vmatmul.mubr.bf16.gmra.mxu0 %v1513
    %v1552 = vpop.f32.mrf.mxu0
    %v1553 = vadd.f32 0.0, %v1552
    %v1554 = vpop.f32.mrf.mxu0
    %v1555 = vpop.f32.mrf.mxu0
    %v1556 = vadd.f32 0.0, %v1555
    %v1557 = vpop.f32.mrf.mxu0
    %1558 = vdwg.mxu0
    %v1559 = vmul.f32 %v1553, 0.35355338
    %v1560 = vmul.f32 %v1556, 0.35355338
    %v1561 = vadd.f32 %v1559, %v155
    %v1562 = vadd.f32 %v1560, %v156
    %v1563 = vsel %vm332, %v1561, -inf
    %1564 = vmax.xlane.f32.xlu0 %v1563
    %v1565 = vpop.xlane.xlu0 %1564
    %v1566 = vsel %vm332, %v1562, -inf
    %1567 = vmax.xlane.f32.xlu0 %v1566
    %v1568 = vpop.xlane.xlu0 %1567
    %v1569 = vsub.f32 %v1561, %v1565
    %v1570 = vsub.f32 %v1562, %v1568
    %v1571 = vmul.f32 %v1569, 1.442695
    %v1572 = vpow.pop %v1571
    %v1573 = vmul.f32 %v1570, 1.442695
    %v1574 = vpow.pop %v1573
    %v1575 = vsel %vm332, %v1572, 0.0
    %1576 = vadd.xlane.f32.xlu0 %v1575
    %v1577 = vpop.xlane.xlu0 %1576
    %v1578 = vsel %vm332, %v1574, 0.0
    %1579 = vadd.xlane.f32.xlu0 %v1578
    %v1580 = vpop.xlane.xlu0 %1579
    %v1581 = vrcp.pop %v1577
    %v1582 = vrcp.pop %v1580
    %v1583 = vmul.f32 %v1572, %v1581
    %v1584 = vmul.f32 %v1574, %v1582
    %v1585 = vpack.c.bf16 %v1584, %v1583
    %1586 = vrot.lane.b32.xlu0 %v1133, 40
    %v1587 = vpop.permute.xlu0 %1586
    %v1590 = vsel %vm332, %v1585, 0
    %1592 = vmatprep.subr.bf16.mxu0 0
    %1593 = vmatpush1.bf16.msra.mxu0 0
    %1594 = vmatprep.subr.bf16.mxu0 0
    %1595 = vmatpush1.bf16.msra.mxu0 0
    %1596 = vmatprep.subr.bf16.mxu0 0
    %1597 = vmatpush1.bf16.msra.mxu0 0
    %1598 = vmatprep.subr.bf16.mxu0 0
    %1599 = vmatpush1.bf16.msra.mxu0 0
    %1600 = vmatprep.subr.bf16.mxu0 0
    %1601 = vmatpush1.bf16.msra.mxu0 0
    %1602 = vmatprep.subr.bf16.mxu0 0
    %1603 = vmatpush1.bf16.msra.mxu0 0
    %1604 = vmatprep.subr.bf16.mxu0 0
    %1605 = vmatpush1.bf16.msra.mxu0 0
    %1606 = vmatprep.subr.bf16.mxu0 0
    %1607 = vmatpush1.bf16.msra.mxu0 %v1587
    %1608 = vmatprep.subr.bf16.mxu0 0
    %1609 = vmatpush2.bf16.msra.mxu0 0
    %1610 = vmatprep.subr.bf16.mxu0 0
    %1611 = vmatpush2.bf16.msra.mxu0 0
    %1612 = vmatprep.subr.bf16.mxu0 0
    %1613 = vmatpush2.bf16.msra.mxu0 0
    %1614 = vmatprep.subr.bf16.mxu0 0
    %1615 = vmatpush2.bf16.msra.mxu0 0
    %1616 = vmatprep.subr.bf16.mxu0 0
    %1617 = vmatpush2.bf16.msra.mxu0 0
    %1618 = vmatprep.subr.bf16.mxu0 0
    %1619 = vmatpush2.bf16.msra.mxu0 0
    %1620 = vmatprep.subr.bf16.mxu0 0
    %1621 = vmatpush2.bf16.msra.mxu0 0
    %1622 = vmatprep.subr.bf16.mxu0 0
    %1623 = vmatpush2.bf16.msra.mxu0 0
    %1624 = vmatprep.mubr.bf16.mxu0 0
    %1625 = vmatmul.mubr.bf16.gmra.mxu0 %v1590
    %v1626 = vpop.f32.mrf.mxu0
    %v1627 = vadd.f32 0.0, %v1626
    %v1628 = vpop.f32.mrf.mxu0
    %v1629 = vpop.f32.mrf.mxu0
    %v1630 = vadd.f32 0.0, %v1629
    %v1631 = vpop.f32.mrf.mxu0
    %1632 = vdwg.mxu0
    %1635 = vrot.lane.b32.xlu0 %v1377, 8
    %v1636 = vpop.permute.xlu0 %1635
    %1637 = vrot.lane.b32.xlu0 %v1380, 8
    %v1638 = vpop.permute.xlu0 %1637
    %1643 = vrot.lane.b32.xlu0 %v1502, 16
    %v1644 = vpop.permute.xlu0 %1643
    %1645 = vrot.lane.b32.xlu0 %v1505, 16
    %v1646 = vpop.permute.xlu0 %1645
    %1651 = vrot.lane.b32.xlu0 %v1627, 24
    %v1652 = vpop.permute.xlu0 %1651
    %1653 = vrot.lane.b32.xlu0 %v1630, 24
    %v1654 = vpop.permute.xlu0 %1653
    %v1657 = vsel %vm280, %v1252, %v1636
    %v1658 = vsel %vm280, %v1255, %v1638
    %v1659 = vsel %vm332, %v1657, %v1644
    %v1660 = vsel %vm332, %v1658, %v1646
    %v1661 = vsel %vm806, %v1659, %v1652
    %v1662 = vsel %vm806, %v1660, %v1654
    %v1663 = vpack.c.bf16 %v1662, %v1661
    %v1664 = vlaneseq
    %v1665 = vshrl.u32 %v1664, 7
    %v1666 = vsub.s32 0, %v1665
    %v1667 = vrot.slane %v1043, %v1666
    %1670 = vrot.lane.b32.xlu0 %v1083, 32
    %v1671 = vpop.permute.xlu0 %1670
    %1672 = vrot.lane.b32.xlu0 %v1084, 32
    %v1673 = vpop.permute.xlu0 %1672
    %v1677 = vsel %vm185, %v1663, 0
    %1679 = vmatprep.subr.bf16.mxu0 0
    %1680 = vmatpush1.bf16.msra.mxu0 0
    %1681 = vmatprep.subr.bf16.mxu0 0
    %1682 = vmatpush1.bf16.msra.mxu0 0
    %1683 = vmatprep.subr.bf16.mxu0 0
    %1684 = vmatpush1.bf16.msra.mxu0 0
    %1685 = vmatprep.subr.bf16.mxu0 0
    %1686 = vmatpush1.bf16.msra.mxu0 0
    %1687 = vmatprep.subr.bf16.mxu0 0
    %1688 = vmatpush1.bf16.msra.mxu0 0
    %1689 = vmatprep.subr.bf16.mxu0 0
    %1690 = vmatpush1.bf16.msra.mxu0 0
    %1691 = vmatprep.subr.bf16.mxu0 0
    %1692 = vmatpush1.bf16.msra.mxu0 %v1673
    %1693 = vmatprep.subr.bf16.mxu0 0
    %1694 = vmatpush1.bf16.msra.mxu0 %v1671
    %1695 = vmatprep.subr.bf16.mxu0 0
    %1696 = vmatpush2.bf16.msra.mxu0 0
    %1697 = vmatprep.subr.bf16.mxu0 0
    %1698 = vmatpush2.bf16.msra.mxu0 0
    %1699 = vmatprep.subr.bf16.mxu0 0
    %1700 = vmatpush2.bf16.msra.mxu0 0
    %1701 = vmatprep.subr.bf16.mxu0 0
    %1702 = vmatpush2.bf16.msra.mxu0 0
    %1703 = vmatprep.subr.bf16.mxu0 0
    %1704 = vmatpush2.bf16.msra.mxu0 0
    %1705 = vmatprep.subr.bf16.mxu0 0
    %1706 = vmatpush2.bf16.msra.mxu0 0
    %1707 = vmatprep.subr.bf16.mxu0 0
    %1708 = vmatpush2.bf16.msra.mxu0 0
    %1709 = vmatprep.subr.bf16.mxu0 0
    %1710 = vmatpush2.bf16.msra.mxu0 0
    %1711 = vmatprep.mubr.bf16.mxu0 0
    %1712 = vmatmul.mubr.bf16.gmra.mxu0 %v1677
    %v1713 = vpop.f32.mrf.mxu0
    %v1714 = vadd.f32 %v1667, %v1713
    %v1715 = vpop.f32.mrf.mxu0
    %v1716 = vpop.f32.mrf.mxu0
    %v1717 = vadd.f32 %v1667, %v1716
    %v1718 = vpop.f32.mrf.mxu0
    %1719 = vdwg.mxu0
    %v1720 = vadd.f32 %v1013, %v1714
    %v1721 = vadd.f32 %v1014, %v1717
    %v1722 = vsel %vm185, %v1720, 0.0
    %1723 = vadd.xlane.f32.xlu0 %v1722
    %v1724 = vpop.xlane.xlu0 %1723
    %v1725 = vsel %vm185, %v1721, 0.0
    %1726 = vadd.xlane.f32.xlu0 %v1725
    %v1727 = vpop.xlane.xlu0 %1726
    %v1728 = vmul.f32 %v1724, %v192
    %v1729 = vmul.f32 %v1727, %v192
    %v1730 = vsub.f32 %v1720, %v1728
    %v1731 = vsub.f32 %v1721, %v1729
    %v1732 = vmul.f32 %v1730, %v1730
    %v1733 = vmul.f32 %v1731, %v1731
    %v1734 = vsel %vm185, %v1732, 0.0
    %1735 = vadd.xlane.f32.xlu0 %v1734
    %v1736 = vpop.xlane.xlu0 %1735
    %v1737 = vsel %vm185, %v1733, 0.0
    %1738 = vadd.xlane.f32.xlu0 %v1737
    %v1739 = vpop.xlane.xlu0 %1738
    %v1740 = vmul.f32 %v1736, %v192
    %v1741 = vmul.f32 %v1739, %v192
    %v1742 = vadd.f32 %v1740, 1e-05
    %v1743 = vadd.f32 %v1741, 1e-05
    %v1744 = vrsqrt.pop %v1742
    %v1745 = vrsqrt.pop %v1743
    %v1746 = vmul.f32 %v1730, %v1744
    %v1747 = vmul.f32 %v1731, %v1745
    %1748 = vrot.lane.b32.xlu0 %v1073, 64
    %v1749 = vpop.permute.xlu0 %1748
    %v1751 = vmul.f32 %v1746, %v1749
    %v1752 = vmul.f32 %v1747, %v1749
    %1753 = vrot.lane.b32.xlu0 %v1073, 32
    %v1754 = vpop.permute.xlu0 %1753
    %v1756 = vadd.f32 %v1751, %v1754
    %v1757 = vadd.f32 %v1752, %v1754
    %v1758 = vpack.c.bf16 %v1757, %v1756
    %v1759 = vpack.c.bf16 %v1021, %v1020
    %v1760 = vpack.c.bf16 %v1023, %v1022
    %v1761 = vlaneseq
    %v1762 = vshrl.u32 %v1761, 7
    %v1763 = vsub.s32 0, %v1762
    %v1764 = vrot.slane %v1041, %v1763
    %v1766 = vsel %vm185, %v1758, 0
    %1768 = vmatprep.subr.bf16.mxu0 0
    %1769 = vmatpush1.bf16.msra.mxu0 0
    %1770 = vmatprep.subr.bf16.mxu0 0
    %1771 = vmatpush1.bf16.msra.mxu0 0
    %1772 = vmatprep.subr.bf16.mxu0 0
    %1773 = vmatpush1.bf16.msra.mxu0 0
    %1774 = vmatprep.subr.bf16.mxu0 0
    %1775 = vmatpush1.bf16.msra.mxu0 0
    %1776 = vmatprep.subr.bf16.mxu0 0
    %1777 = vmatpush1.bf16.msra.mxu0 0
    %1778 = vmatprep.subr.bf16.mxu0 0
    %1779 = vmatpush1.bf16.msra.mxu0 0
    %1780 = vmatprep.subr.bf16.mxu0 0
    %1781 = vmatpush1.bf16.msra.mxu0 %v1760
    %1782 = vmatprep.subr.bf16.mxu0 0
    %1783 = vmatpush1.bf16.msra.mxu0 %v1759
    %1784 = vmatprep.subr.bf16.mxu0 0
    %1785 = vmatpush2.bf16.msra.mxu0 0
    %1786 = vmatprep.subr.bf16.mxu0 0
    %1787 = vmatpush2.bf16.msra.mxu0 0
    %1788 = vmatprep.subr.bf16.mxu0 0
    %1789 = vmatpush2.bf16.msra.mxu0 0
    %1790 = vmatprep.subr.bf16.mxu0 0
    %1791 = vmatpush2.bf16.msra.mxu0 0
    %1792 = vmatprep.subr.bf16.mxu0 0
    %1793 = vmatpush2.bf16.msra.mxu0 0
    %1794 = vmatprep.subr.bf16.mxu0 0
    %1795 = vmatpush2.bf16.msra.mxu0 0
    %1796 = vmatprep.subr.bf16.mxu0 0
    %1797 = vmatpush2.bf16.msra.mxu0 0
    %1798 = vmatprep.subr.bf16.mxu0 0
    %1799 = vmatpush2.bf16.msra.mxu0 0
    %1800 = vmatprep.mubr.bf16.mxu0 0
    %1801 = vmatmul.mubr.bf16.gmra.mxu0 %v1766
    %v1802 = vpop.f32.mrf.mxu0
    %v1803 = vadd.f32 %v1764, %v1802
    %v1804 = vpop.f32.mrf.mxu0
    %v1805 = vpop.f32.mrf.mxu0
    %v1806 = vadd.f32 %v1764, %v1805
    %v1807 = vpop.f32.mrf.mxu0
    %1808 = vdwg.mxu0
    %v1809 = vmax.f32 %v1803, 0.0
    %v1810 = vmax.f32 %v1806, 0.0
    %v1811 = vpack.c.bf16 %v1810, %v1809
    %v1812 = vpack.c.bf16 %v1025, %v1024
    %v1813 = vpack.c.bf16 %v1027, %v1026
    %v1814 = vpack.c.bf16 %v1029, %v1028
    %v1815 = vpack.c.bf16 %v1031, %v1030
    %v1816 = vpack.c.bf16 %v1033, %v1032
    %v1817 = vpack.c.bf16 %v1035, %v1034
    %v1818 = vpack.c.bf16 %v1037, %v1036
    %v1819 = vpack.c.bf16 %v1039, %v1038
    %1820 = vmatprep.subr.bf16.mxu0 0
    %1821 = vmatpush1.bf16.msra.mxu0 %v1819
    %1822 = vmatprep.subr.bf16.mxu0 0
    %1823 = vmatpush1.bf16.msra.mxu0 %v1818
    %1824 = vmatprep.subr.bf16.mxu0 0
    %1825 = vmatpush1.bf16.msra.mxu0 %v1817
    %1826 = vmatprep.subr.bf16.mxu0 0
    %1827 = vmatpush1.bf16.msra.mxu0 %v1816
    %1828 = vmatprep.subr.bf16.mxu0 0
    %1829 = vmatpush1.bf16.msra.mxu0 %v1815
    %1830 = vmatprep.subr.bf16.mxu0 0
    %1831 = vmatpush1.bf16.msra.mxu0 %v1814
    %1832 = vmatprep.subr.bf16.mxu0 0
    %1833 = vmatpush1.bf16.msra.mxu0 %v1813
    %1834 = vmatprep.subr.bf16.mxu0 0
    %1835 = vmatpush1.bf16.msra.mxu0 %v1812
    %1836 = vmatprep.subr.bf16.mxu0 0
    %1837 = vmatpush2.bf16.msra.mxu0 0
    %1838 = vmatprep.subr.bf16.mxu0 0
    %1839 = vmatpush2.bf16.msra.mxu0 0
    %1840 = vmatprep.subr.bf16.mxu0 0
    %1841 = vmatpush2.bf16.msra.mxu0 0
    %1842 = vmatprep.subr.bf16.mxu0 0
    %1843 = vmatpush2.bf16.msra.mxu0 0
    %1844 = vmatprep.subr.bf16.mxu0 0
    %1845 = vmatpush2.bf16.msra.mxu0 0
    %1846 = vmatprep.subr.bf16.mxu0 0
    %1847 = vmatpush2.bf16.msra.mxu0 0
    %1848 = vmatprep.subr.bf16.mxu0 0
    %1849 = vmatpush2.bf16.msra.mxu0 0
    %1850 = vmatprep.subr.bf16.mxu0 0
    %1851 = vmatpush2.bf16.msra.mxu0 0
    %1852 = vmatprep.mubr.bf16.mxu0 0
    %1853 = vmatmul.mubr.bf16.gmra.mxu0 %v1811
    %v1854 = vpop.f32.mrf.mxu0
    %v1855 = vadd.f32 0.0, %v1854
    %v1856 = vpop.f32.mrf.mxu0
    %v1857 = vpop.f32.mrf.mxu0
    %v1858 = vadd.f32 0.0, %v1857
    %v1859 = vpop.f32.mrf.mxu0
    %1860 = vdwg.mxu0
    %v1861 = vadd.f32 %v1720, %v1855
    %v1862 = vadd.f32 %v1721, %v1858
    %1864 = vrot.lane.b32.xlu0 %v1667, 96
    %v1865 = vpop.permute.xlu0 %1864
    %v1867 = vadd.f32 %v1861, %v1865
    %v1868 = vadd.f32 %v1862, %v1865
    %v1869 = vld [vmem:[#allocation2 + $0x50] sm:$0xff]
    %v1870 = vld [vmem:[#allocation2 + $0x58] sm:$0xff]
    %v1871 = vld [vmem:[#allocation2 + $0x60] sm:$0xff]
    %v1872 = vld [vmem:[#allocation2 + $0x68] sm:$0xff]
    %v1873 = vld [vmem:[#allocation2 + $0x70] sm:$0x1]
    %v1874 = vpack.c.bf16 %v1868, %v1867
    %v1875 = vpack.c.bf16 %v1870, %v1869
    %v1876 = vpack.c.bf16 %v1872, %v1871
    %v1877 = vlaneseq
    %v1878 = vshrl.u32 %v1877, 7
    %v1879 = vsub.s32 0, %v1878
    %v1880 = vrot.slane %v1873, %v1879
    %v1882 = vsel %vm185, %v1874, 0
    %1884 = vmatprep.subr.bf16.mxu0 0
    %1885 = vmatpush1.bf16.msra.mxu0 0
    %1886 = vmatprep.subr.bf16.mxu0 0
    %1887 = vmatpush1.bf16.msra.mxu0 0
    %1888 = vmatprep.subr.bf16.mxu0 0
    %1889 = vmatpush1.bf16.msra.mxu0 0
    %1890 = vmatprep.subr.bf16.mxu0 0
    %1891 = vmatpush1.bf16.msra.mxu0 0
    %1892 = vmatprep.subr.bf16.mxu0 0
    %1893 = vmatpush1.bf16.msra.mxu0 0
    %1894 = vmatprep.subr.bf16.mxu0 0
    %1895 = vmatpush1.bf16.msra.mxu0 0
    %1896 = vmatprep.subr.bf16.mxu0 0
    %1897 = vmatpush1.bf16.msra.mxu0 %v1876
    %1898 = vmatprep.subr.bf16.mxu0 0
    %1899 = vmatpush1.bf16.msra.mxu0 %v1875
    %1900 = vmatprep.subr.bf16.mxu0 0
    %1901 = vmatpush2.bf16.msra.mxu0 0
    %1902 = vmatprep.subr.bf16.mxu0 0
    %1903 = vmatpush2.bf16.msra.mxu0 0
    %1904 = vmatprep.subr.bf16.mxu0 0
    %1905 = vmatpush2.bf16.msra.mxu0 0
    %1906 = vmatprep.subr.bf16.mxu0 0
    %1907 = vmatpush2.bf16.msra.mxu0 0
    %1908 = vmatprep.subr.bf16.mxu0 0
    %1909 = vmatpush2.bf16.msra.mxu0 0
    %1910 = vmatprep.subr.bf16.mxu0 0
    %1911 = vmatpush2.bf16.msra.mxu0 0
    %1912 = vmatprep.subr.bf16.mxu0 0
    %1913 = vmatpush2.bf16.msra.mxu0 0
    %1914 = vmatprep.subr.bf16.mxu0 0
    %1915 = vmatpush2.bf16.msra.mxu0 0
    %1916 = vmatprep.mubr.bf16.mxu0 0
    %1917 = vmatmul.mubr.bf16.gmra.mxu0 %v1882
    %v1918 = vpop.f32.mrf.mxu0
    %v1919 = vadd.f32 %v1880, %v1918
    %v1920 = vpop.f32.mrf.mxu0
    %v1921 = vpop.f32.mrf.mxu0
    %v1922 = vadd.f32 %v1880, %v1921
    %v1923 = vpop.f32.mrf.mxu0
    %1924 = vdwg.mxu0
    %1925 = vst [vmem:[#allocation7] sm:$0xff] %v1919
    %1926 = vst [vmem:[#allocation7 + $0x8] sm:$0xff] %v1922
    %1929 = vrot.lane.b32.xlu0 %v270, 96
    %v1930 = vpop.permute.xlu0 %1929
    %1931 = vrot.lane.b32.xlu0 %v273, 96
    %v1932 = vpop.permute.xlu0 %1931
    %1937 = vrot.lane.b32.xlu0 %v1127, 32
    %v1938 = vpop.permute.xlu0 %1937
    %1939 = vrot.lane.b32.xlu0 %v1130, 32
    %v1940 = vpop.permute.xlu0 %1939
    %v1943 = vsel %vm73, %v1930, %v1938
    %v1944 = vsel %vm73, %v1932, %v1940
    %vm1945 = vcmask 785408
    %v1946 = vsel %vm1945, %v1943, %v1938
    %v1947 = vsel %vm1945, %v1944, %v1940
    %1948 = vst [vmem:[#allocation8] sm:$0xff] %v1946
    %1949 = vst [vmem:[#allocation8 + $0x8] sm:$0xff] %v1947
    // Predicated region
    $region22: #{tpu_custom_call.1} parent=1 // pred_check
      _
    $region23: #{tpu_custom_call.1} parent=1 // pred_check_branch
      %1951 = sbr.rel (0) target = $region25
    $region24: #{tpu_custom_call.1} parent=1 // pred_region
      %s1953 = ssub.s32 256, 256
      %1954 = vsyncadd [#allocation4], %s1953
      %s1955 = sshll.u32 [#allocation7], 4
      %s1956 = int_to_ptr.vmem [resolvable:$true] %s1955
      %1961 = dma.vmem_to_hbm [thread:$0]  %s1956, 256, %s3, [#allocation4], 128, 128, 8
    $region25: #{tpu_custom_call.1} parent=1 // pred_fallthru
      _
    // Predicated region
    $region26: #{tpu_custom_call.1} parent=1 // pred_check
      _
    $region27: #{tpu_custom_call.1} parent=1 // pred_check_branch
      %1963 = sbr.rel (0) target = $region29
    $region28: #{tpu_custom_call.1} parent=1 // pred_region
      %s1965 = ssub.s32 256, 256
      %1966 = vsyncadd [#allocation9], %s1965
      %s1967 = sshll.u32 [#allocation8], 4
      %s1968 = int_to_ptr.vmem [resolvable:$true] %s1967
      %1973 = dma.vmem_to_hbm [thread:$0]  %s1968, 256, %s4, [#allocation9], 128, 128, 8
    $region29: #{tpu_custom_call.1} parent=1 // pred_fallthru
      _
    // Predicated region
    $region30: #{tpu_custom_call.1} parent=1 // pred_check
      _
    $region31: #{tpu_custom_call.1} parent=1 // pred_check_branch
      %1975 = sbr.rel (0) target = $region33
    $region32: #{tpu_custom_call.1} parent=1 // pred_region
      %1976 = dma.done [#allocation4], 256
    $region33: #{tpu_custom_call.1} parent=1 // pred_fallthru
      _
    // Predicated region
    $region34: #{tpu_custom_call.1} parent=1 // pred_check
      _
    $region35: #{tpu_custom_call.1} parent=1 // pred_check_branch
      %1978 = sbr.rel (0) target = $region37
    $region36: #{tpu_custom_call.1} parent=1 // pred_region
      %1979 = dma.done [#allocation9], 256
    $region37: #{tpu_custom_call.1} parent=1 // pred_fallthru
      _
    %1980 = vsyncpa [#allocation3], 1
    %1981 = vsyncpa [#allocation6], 1
    %1982 = vsyncpa [#allocation4], 1
    %1983 = vsyncpa [#allocation9], 1

</llo_original>
